<compile_context>
chip_gen: v6e
topology: v6e:2x2x1
jax: 0.10.0
libtpu: 0.0.40
codegen_flags: <defaults>
</compile_context>

<pallas_src>
import jax
import jax.numpy as jnp
from jax import lax
from jax.experimental import pallas as pl
from jax.experimental.pallas import tpu as pltpu


def _round_up(x, m):
    return ((x + m - 1) // m) * m


def encoder_kernel(ids_ref, emb_ref, wih_ref, whh_ref, bih_ref, bhh_ref,
                   out_ref, gi_ref):
    """Fused Embedding -> Dropout(eval) -> GRU (PyTorch gate order r, z, n).

    ids_ref : (S*Bp, 1)  i32   token ids, seq-major, flattened
    emb_ref : (Vp, Ep)   f32   embedding table (row padding_idx=2 zeroed)
    wih_ref : (Ep, 3Hp)  f32   W_ih^T, per-gate lane-padded
    whh_ref : (Hp, 3Hp)  f32   W_hh^T, per-gate lane-padded
    bih_ref : (1, 3Hp)   f32
    bhh_ref : (1, 3Hp)   f32
    out_ref : (Bp, Hp)   f32   final hidden state h_n (lane-dense store)
    gi_ref  : (S*Bp, 3Hp) f32  VMEM scratch for the hoisted input projection
    """
    SB = ids_ref.shape[0]
    Bp, Hp = out_ref.shape
    S = SB // Bp
    Vp, Ep = emb_ref.shape

    # ---- Fused embedding lookup as a one-hot MXU matmul (tiny vocab). ----
    ids = ids_ref[...]                                          # (SB, 1) i32
    vocab_iota = lax.broadcasted_iota(jnp.int32, (SB, Vp), 1)   # lane iota
    onehot = (ids == vocab_iota).astype(jnp.float32)            # (SB, Vp)
    x = jnp.dot(onehot, emb_ref[...], preferred_element_type=jnp.float32)
    # Dropout(p=0.5) is identity in eval/inference mode.
    # TODO(synk): training-mode dropout via pltpu.prng_random_bits not implemented.

    # ---- Hoisted input projection: one big MXU matmul off the serial path. ----
    gi_ref[...] = (
        jnp.dot(x, wih_ref[...], preferred_element_type=jnp.float32)
        + bih_ref[...]
    )

    w_hh = whh_ref[...]
    # Hoist the b_hh broadcast out of the (unrolled) loop body.
    b_hh = jnp.broadcast_to(bhh_ref[...], (Bp, 3 * Hp))

    def step(t, h):
        off = pl.multiple_of(t * Bp, Bp)
        gi = gi_ref[pl.ds(off, Bp), :]                                # (Bp, 3Hp)
        gh = jnp.dot(h, w_hh, preferred_element_type=jnp.float32) + b_hh
        r = jax.nn.sigmoid(gi[:, 0:Hp] + gh[:, 0:Hp])
        z = jax.nn.sigmoid(gi[:, Hp:2 * Hp] + gh[:, Hp:2 * Hp])
        n = jnp.tanh(gi[:, 2 * Hp:3 * Hp] + r * gh[:, 2 * Hp:3 * Hp])
        return (1.0 - z) * n + z * h

    h0 = jnp.zeros((Bp, Hp), jnp.float32)  # init in-kernel: no h0 DMA
    out_ref[...] = lax.fori_loop(0, S, step, h0, unroll=True)


def encoder_forward(src, params):
    """src: (B, S) int32 token ids. Returns h_n of shape (1, B, H) (PyTorch-like)."""
    emb_table = params["embedding"]          # (Vp, Ep)
    w_ih_T = params["w_ih_T"]                # (Ep, 3Hp)
    w_hh_T = params["w_hh_T"]                # (Hp, 3Hp)
    b_ih = params["b_ih"]                    # (1, 3Hp)
    b_hh = params["b_hh"]                    # (1, 3Hp)
    H = params["hidden_size"]

    B, S = src.shape
    Vp, Ep = emb_table.shape
    Hp = w_hh_T.shape[0]
    Bp = _round_up(max(B, 8), 8)

    # Pad the batch with padding_idx=2 tokens -> their embeddings are zero rows,
    # so no explicit float-tensor padding is needed.
    src_p = jnp.full((Bp, S), 2, dtype=jnp.int32)
    src_p = src_p.at[:B].set(src.astype(jnp.int32))
    ids = src_p.T.reshape(S * Bp, 1)         # seq-major, flattened

    flops = (2 * S * Bp * Vp * Ep            # one-hot embedding matmul
             + 2 * S * Bp * Ep * 3 * Hp      # hoisted input projection
             + 2 * S * Bp * Hp * 3 * Hp)     # recurrent projection
    bytes_accessed = 4 * (ids.size + emb_table.size + w_ih_T.size
                          + w_hh_T.size + b_ih.size + b_hh.size + Bp * Hp)

    h_pad = pl.pallas_call(
        encoder_kernel,
        out_shape=jax.ShapeDtypeStruct((Bp, Hp), jnp.float32),
        in_specs=[pl.BlockSpec(memory_space=pltpu.MemorySpace.VMEM)] * 6,
        out_specs=pl.BlockSpec(memory_space=pltpu.MemorySpace.VMEM),
        scratch_shapes=[pltpu.VMEM((S * Bp, 3 * Hp), jnp.float32)],
        compiler_params=pltpu.CompilerParams(vmem_limit_bytes=16 * 1024 * 1024),
        cost_estimate=pl.CostEstimate(
            flops=int(flops),
            transcendentals=int(3 * S * Bp * Hp),
            bytes_accessed=int(bytes_accessed)),
    )(ids, emb_table, w_ih_T, w_hh_T, b_ih, b_hh)

    # Drop the padded batch rows / hidden lanes; add the num_layers=1 axis.
    return h_pad[None, :B, :H]


def _pad_gate_blocked_T(w_T, in_dim, in_dim_p, H, Hp):
    """(in_dim, 3H) with column blocks [r|z|n] -> (in_dim_p, 3Hp), per-gate padded."""
    w3 = w_T.reshape(in_dim, 3, H)
    w3 = jnp.pad(w3, ((0, in_dim_p - in_dim), (0, 0), (0, Hp - H)))
    return w3.reshape(in_dim_p, 3 * Hp)


def _pad_gate_blocked_bias(b, H, Hp):
    """(3H,) -> (1, 3Hp), per-gate padded."""
    b3 = b.reshape(3, H)
    b3 = jnp.pad(b3, ((0, 0), (0, Hp - H)))
    return b3.reshape(1, 3 * Hp)


def init_params(key, src_vocab_size, embed_size, hidden_size):
    k_emb, k_wih, k_whh, k_bih, k_bhh = jax.random.split(key, 5)
    scale = 1.0 / jnp.sqrt(hidden_size)

    E, H, V = embed_size, hidden_size, src_vocab_size
    Ep = _round_up(max(E, 128), 128)
    Hp = _round_up(max(H, 128), 128)
    Vp = _round_up(max(V, 128), 128)

    embedding = jax.random.normal(k_emb, (V, E), jnp.float32)
    embedding = embedding.at[2].set(0.0)  # padding_idx=2

    w_ih = jax.random.uniform(k_wih, (3 * H, E), jnp.float32, -scale, scale)
    w_hh = jax.random.uniform(k_whh, (3 * H, H), jnp.float32, -scale, scale)
    b_ih = jax.random.uniform(k_bih, (3 * H,), jnp.float32, -scale, scale)
    b_hh = jax.random.uniform(k_bhh, (3 * H,), jnp.float32, -scale, scale)

    params = {
        # Lane/sublane-padded tensors consumed by the Pallas kernel.
        "embedding": jnp.pad(embedding, ((0, Vp - V), (0, Ep - E))),  # (Vp, Ep)
        "w_ih_T": _pad_gate_blocked_T(w_ih.T, E, Ep, H, Hp),          # (Ep, 3Hp)
        "w_hh_T": _pad_gate_blocked_T(w_hh.T, H, Hp, H, Hp),          # (Hp, 3Hp)
        "b_ih": _pad_gate_blocked_bias(b_ih, H, Hp),                  # (1, 3Hp)
        "b_hh": _pad_gate_blocked_bias(b_hh, H, Hp),                  # (1, 3Hp)
        "embed_size": E,
        "hidden_size": H,
        # Unpadded copies for the pure-JAX reference.
        "ref_embedding": embedding,
        "ref_w_ih_T": w_ih.T,
        "ref_w_hh_T": w_hh.T,
        "ref_b_ih": b_ih[None, :],
        "ref_b_hh": b_hh[None, :],
    }
    return params


def gru_reference(x_emb, params):
    """Pure-JAX reference of the PyTorch GRU (unpadded weights)."""
    w_ih_T, w_hh_T = params["ref_w_ih_T"], params["ref_w_hh_T"]
    b_ih, b_hh = params["ref_b_ih"], params["ref_b_hh"]
    B = x_emb.shape[0]
    H = params["hidden_size"]
    h = jnp.zeros((B, H), jnp.float32)
    for t in range(x_emb.shape[1]):
        x_t = x_emb[:, t, :]
        gi = x_t @ w_ih_T + b_ih
        gh = h @ w_hh_T + b_hh
        r = jax.nn.sigmoid(gi[:, 0:H] + gh[:, 0:H])
        z = jax.nn.sigmoid(gi[:, H:2 * H] + gh[:, H:2 * H])
        n = jnp.tanh(gi[:, 2 * H:3 * H] + r * gh[:, 2 * H:3 * H])
        h = (1.0 - z) * n + z * h
    return h[None, :, :]


if __name__ == "__main__":
    SRC_VOCAB, EMBED, HIDDEN = 16, 32, 32
    B, S = 2, 8

    key = jax.random.PRNGKey(0)
    k_params, k_src = jax.random.split(key)
    params = init_params(k_params, SRC_VOCAB, EMBED, HIDDEN)

    src = jax.random.randint(k_src, (B, S), 0, SRC_VOCAB, dtype=jnp.int32)

    h_n = encoder_forward(src, params)
    h_n = jax.block_until_ready(h_n)

    # Sanity check against pure-JAX reference (eval-mode dropout == identity).
    x_emb = jnp.take(params["ref_embedding"], src, axis=0)   # (B, S, E)
    ref = gru_reference(x_emb, params)
    assert h_n.shape == (1, B, HIDDEN)
    assert jnp.allclose(h_n, ref, atol=1e-4, rtol=1e-4), (
        f"max abs err = {jnp.max(jnp.abs(h_n - ref))}")

    print("KERNEL_OK")
</pallas_src>

<mosaic_0001>
module attributes {stable_mosaic.version = 11 : i64} {
  func.func @encoder_kernel(%arg0: memref<64x1xi32, #tpu.memory_space<vmem>>, %arg1: memref<128x128xf32, #tpu.memory_space<vmem>>, %arg2: memref<128x384xf32, #tpu.memory_space<vmem>>, %arg3: memref<128x384xf32, #tpu.memory_space<vmem>>, %arg4: memref<1x384xf32, #tpu.memory_space<vmem>>, %arg5: memref<1x384xf32, #tpu.memory_space<vmem>>, %arg6: memref<8x128xf32, #tpu.memory_space<vmem>>, %arg7: memref<64x384xf32, #tpu.memory_space<vmem>>) attributes {dimension_semantics = [], scalar_prefetch = 0 : i64, scratch_operands = 1 : i64, tpu.core_type = #tpu.core_type<tc>} {
    %c0 = arith.constant 0 : index
    %c0_0 = arith.constant 0 : index
    %0 = vector.load %arg0[%c0, %c0_0] : memref<64x1xi32, #tpu.memory_space<vmem>>, vector<64x1xi32>
    %1 = tpu.iota {dimensions = array<i32: 1>} : vector<64x128xi32>
    %2 = vector.broadcast %0 : vector<64x1xi32> to vector<64x128xi32>
    %3 = arith.cmpi eq, %2, %1 : vector<64x128xi32>
    %4 = arith.extui %3 : vector<64x128xi1> to vector<64x128xi32>
    %5 = arith.sitofp %4 : vector<64x128xi32> to vector<64x128xf32>
    %c0_1 = arith.constant 0 : index
    %c0_2 = arith.constant 0 : index
    %6 = vector.load %arg1[%c0_1, %c0_2] : memref<128x128xf32, #tpu.memory_space<vmem>>, vector<128x128xf32>
    %cst = arith.constant dense<0.000000e+00> : vector<64x128xf32>
    %7 = tpu.matmul %5, %6, %cst {dimension_numbers = #tpu.dot_dimension_numbers<[1], [0], [0], [1], [0, 0, 1, 1], [], []>} : vector<64x128xf32>, vector<128x128xf32>, vector<64x128xf32> -> vector<64x128xf32>
    %c0_3 = arith.constant 0 : index
    %c0_4 = arith.constant 0 : index
    %8 = vector.load %arg2[%c0_3, %c0_4] : memref<128x384xf32, #tpu.memory_space<vmem>>, vector<128x384xf32>
    %cst_5 = arith.constant dense<0.000000e+00> : vector<64x384xf32>
    %9 = tpu.matmul %7, %8, %cst_5 {dimension_numbers = #tpu.dot_dimension_numbers<[1], [0], [0], [1], [0, 0, 1, 1], [], []>} : vector<64x128xf32>, vector<128x384xf32>, vector<64x384xf32> -> vector<64x384xf32>
    %c0_6 = arith.constant 0 : index
    %c0_7 = arith.constant 0 : index
    %10 = vector.load %arg4[%c0_6, %c0_7] : memref<1x384xf32, #tpu.memory_space<vmem>>, vector<1x384xf32>
    %11 = vector.broadcast %10 : vector<1x384xf32> to vector<64x384xf32>
    %12 = arith.addf %9, %11 : vector<64x384xf32>
    %c0_8 = arith.constant 0 : index
    %c0_9 = arith.constant 0 : index
    %13 = vector.load %arg7[%c0_8, %c0_9] : memref<64x384xf32, #tpu.memory_space<vmem>>, vector<64x384xf32>
    tpu.vector_store %arg7[%c0_8, %c0_9], %12 {strides = array<i32>} : memref<64x384xf32, #tpu.memory_space<vmem>>, vector<64x384xf32>,
    %c0_10 = arith.constant 0 : index
    %c0_11 = arith.constant 0 : index
    %14 = vector.load %arg3[%c0_10, %c0_11] : memref<128x384xf32, #tpu.memory_space<vmem>>, vector<128x384xf32>
    %c0_12 = arith.constant 0 : index
    %c0_13 = arith.constant 0 : index
    %15 = vector.load %arg5[%c0_12, %c0_13] : memref<1x384xf32, #tpu.memory_space<vmem>>, vector<1x384xf32>
    %16 = vector.shape_cast %15 : vector<1x384xf32> to vector<1x384xf32>
    %17 = vector.broadcast %16 : vector<1x384xf32> to vector<8x384xf32>
    %cst_14 = arith.constant 0.000000e+00 : f32
    %18 = vector.broadcast %cst_14 : f32 to vector<8x128xf32>
    %c0_i32 = arith.constant 0 : i32
    %c8_i32 = arith.constant 8 : i32
    %19 = arith.muli %c0_i32, %c8_i32 : i32
    %20 = tpu.assume_multiple %19, 8 : i32
    %21 = arith.index_cast %20 : i32 to index
    %c0_15 = arith.constant 0 : index
    %22 = vector.load %arg7[%21, %c0_15] : memref<64x384xf32, #tpu.memory_space<vmem>>, vector<8x384xf32>
    %cst_16 = arith.constant dense<0.000000e+00> : vector<8x384xf32>
    %23 = tpu.matmul %18, %14, %cst_16 {dimension_numbers = #tpu.dot_dimension_numbers<[1], [0], [0], [1], [0, 0, 1, 1], [], []>} : vector<8x128xf32>, vector<128x384xf32>, vector<8x384xf32> -> vector<8x384xf32>
    %24 = arith.addf %23, %17 : vector<8x384xf32>
    %25 = vector.extract_strided_slice %22 {offsets = [0, 0], sizes = [8, 128], strides = [1, 1]} : vector<8x384xf32> to vector<8x128xf32>
    %26 = vector.extract_strided_slice %24 {offsets = [0, 0], sizes = [8, 128], strides = [1, 1]} : vector<8x384xf32> to vector<8x128xf32>
    %27 = arith.addf %25, %26 : vector<8x128xf32>
    %28 = arith.negf %27 : vector<8x128xf32>
    %29 = math.exp %28 : vector<8x128xf32>
    %cst_17 = arith.constant 1.000000e+00 : f32
    %30 = vector.broadcast %cst_17 : f32 to vector<8x128xf32>
    %31 = arith.addf %30, %29 : vector<8x128xf32>
    %32 = arith.divf %30, %31 : vector<8x128xf32>
    %33 = vector.extract_strided_slice %22 {offsets = [0, 128], sizes = [8, 128], strides = [1, 1]} : vector<8x384xf32> to vector<8x128xf32>
    %34 = vector.extract_strided_slice %24 {offsets = [0, 128], sizes = [8, 128], strides = [1, 1]} : vector<8x384xf32> to vector<8x128xf32>
    %35 = arith.addf %33, %34 : vector<8x128xf32>
    %36 = arith.negf %35 : vector<8x128xf32>
    %37 = math.exp %36 : vector<8x128xf32>
    %cst_18 = arith.constant 1.000000e+00 : f32
    %38 = vector.broadcast %cst_18 : f32 to vector<8x128xf32>
    %39 = arith.addf %38, %37 : vector<8x128xf32>
    %40 = arith.divf %38, %39 : vector<8x128xf32>
    %41 = vector.extract_strided_slice %22 {offsets = [0, 256], sizes = [8, 128], strides = [1, 1]} : vector<8x384xf32> to vector<8x128xf32>
    %42 = vector.extract_strided_slice %24 {offsets = [0, 256], sizes = [8, 128], strides = [1, 1]} : vector<8x384xf32> to vector<8x128xf32>
    %43 = arith.mulf %32, %42 : vector<8x128xf32>
    %44 = arith.addf %41, %43 : vector<8x128xf32>
    %45 = math.tanh %44 : vector<8x128xf32>
    %cst_19 = arith.constant 1.000000e+00 : f32
    %46 = vector.broadcast %cst_19 : f32 to vector<8x128xf32>
    %47 = arith.subf %46, %40 : vector<8x128xf32>
    %48 = arith.mulf %47, %45 : vector<8x128xf32>
    %49 = arith.mulf %40, %18 : vector<8x128xf32>
    %50 = arith.addf %48, %49 : vector<8x128xf32>
    %c1_i32 = arith.constant 1 : i32
    %c8_i32_20 = arith.constant 8 : i32
    %51 = arith.muli %c1_i32, %c8_i32_20 : i32
    %52 = tpu.assume_multiple %51, 8 : i32
    %53 = arith.index_cast %52 : i32 to index
    %c0_21 = arith.constant 0 : index
    %54 = vector.load %arg7[%53, %c0_21] : memref<64x384xf32, #tpu.memory_space<vmem>>, vector<8x384xf32>
    %cst_22 = arith.constant dense<0.000000e+00> : vector<8x384xf32>
    %55 = tpu.matmul %50, %14, %cst_22 {dimension_numbers = #tpu.dot_dimension_numbers<[1], [0], [0], [1], [0, 0, 1, 1], [], []>} : vector<8x128xf32>, vector<128x384xf32>, vector<8x384xf32> -> vector<8x384xf32>
    %56 = arith.addf %55, %17 : vector<8x384xf32>
    %57 = vector.extract_strided_slice %54 {offsets = [0, 0], sizes = [8, 128], strides = [1, 1]} : vector<8x384xf32> to vector<8x128xf32>
    %58 = vector.extract_strided_slice %56 {offsets = [0, 0], sizes = [8, 128], strides = [1, 1]} : vector<8x384xf32> to vector<8x128xf32>
    %59 = arith.addf %57, %58 : vector<8x128xf32>
    %60 = arith.negf %59 : vector<8x128xf32>
    %61 = math.exp %60 : vector<8x128xf32>
    %cst_23 = arith.constant 1.000000e+00 : f32
    %62 = vector.broadcast %cst_23 : f32 to vector<8x128xf32>
    %63 = arith.addf %62, %61 : vector<8x128xf32>
    %64 = arith.divf %62, %63 : vector<8x128xf32>
    %65 = vector.extract_strided_slice %54 {offsets = [0, 128], sizes = [8, 128], strides = [1, 1]} : vector<8x384xf32> to vector<8x128xf32>
    %66 = vector.extract_strided_slice %56 {offsets = [0, 128], sizes = [8, 128], strides = [1, 1]} : vector<8x384xf32> to vector<8x128xf32>
    %67 = arith.addf %65, %66 : vector<8x128xf32>
    %68 = arith.negf %67 : vector<8x128xf32>
    %69 = math.exp %68 : vector<8x128xf32>
    %cst_24 = arith.constant 1.000000e+00 : f32
    %70 = vector.broadcast %cst_24 : f32 to vector<8x128xf32>
    %71 = arith.addf %70, %69 : vector<8x128xf32>
    %72 = arith.divf %70, %71 : vector<8x128xf32>
    %73 = vector.extract_strided_slice %54 {offsets = [0, 256], sizes = [8, 128], strides = [1, 1]} : vector<8x384xf32> to vector<8x128xf32>
    %74 = vector.extract_strided_slice %56 {offsets = [0, 256], sizes = [8, 128], strides = [1, 1]} : vector<8x384xf32> to vector<8x128xf32>
    %75 = arith.mulf %64, %74 : vector<8x128xf32>
    %76 = arith.addf %73, %75 : vector<8x128xf32>
    %77 = math.tanh %76 : vector<8x128xf32>
    %cst_25 = arith.constant 1.000000e+00 : f32
    %78 = vector.broadcast %cst_25 : f32 to vector<8x128xf32>
    %79 = arith.subf %78, %72 : vector<8x128xf32>
    %80 = arith.mulf %79, %77 : vector<8x128xf32>
    %81 = arith.mulf %72, %50 : vector<8x128xf32>
    %82 = arith.addf %80, %81 : vector<8x128xf32>
    %c2_i32 = arith.constant 2 : i32
    %c8_i32_26 = arith.constant 8 : i32
    %83 = arith.muli %c2_i32, %c8_i32_26 : i32
    %84 = tpu.assume_multiple %83, 8 : i32
    %85 = arith.index_cast %84 : i32 to index
    %c0_27 = arith.constant 0 : index
    %86 = vector.load %arg7[%85, %c0_27] : memref<64x384xf32, #tpu.memory_space<vmem>>, vector<8x384xf32>
    %cst_28 = arith.constant dense<0.000000e+00> : vector<8x384xf32>
    %87 = tpu.matmul %82, %14, %cst_28 {dimension_numbers = #tpu.dot_dimension_numbers<[1], [0], [0], [1], [0, 0, 1, 1], [], []>} : vector<8x128xf32>, vector<128x384xf32>, vector<8x384xf32> -> vector<8x384xf32>
    %88 = arith.addf %87, %17 : vector<8x384xf32>
    %89 = vector.extract_strided_slice %86 {offsets = [0, 0], sizes = [8, 128], strides = [1, 1]} : vector<8x384xf32> to vector<8x128xf32>
    %90 = vector.extract_strided_slice %88 {offsets = [0, 0], sizes = [8, 128], strides = [1, 1]} : vector<8x384xf32> to vector<8x128xf32>
    %91 = arith.addf %89, %90 : vector<8x128xf32>
    %92 = arith.negf %91 : vector<8x128xf32>
    %93 = math.exp %92 : vector<8x128xf32>
    %cst_29 = arith.constant 1.000000e+00 : f32
    %94 = vector.broadcast %cst_29 : f32 to vector<8x128xf32>
    %95 = arith.addf %94, %93 : vector<8x128xf32>
    %96 = arith.divf %94, %95 : vector<8x128xf32>
    %97 = vector.extract_strided_slice %86 {offsets = [0, 128], sizes = [8, 128], strides = [1, 1]} : vector<8x384xf32> to vector<8x128xf32>
    %98 = vector.extract_strided_slice %88 {offsets = [0, 128], sizes = [8, 128], strides = [1, 1]} : vector<8x384xf32> to vector<8x128xf32>
    %99 = arith.addf %97, %98 : vector<8x128xf32>
    %100 = arith.negf %99 : vector<8x128xf32>
    %101 = math.exp %100 : vector<8x128xf32>
    %cst_30 = arith.constant 1.000000e+00 : f32
    %102 = vector.broadcast %cst_30 : f32 to vector<8x128xf32>
    %103 = arith.addf %102, %101 : vector<8x128xf32>
    %104 = arith.divf %102, %103 : vector<8x128xf32>
    %105 = vector.extract_strided_slice %86 {offsets = [0, 256], sizes = [8, 128], strides = [1, 1]} : vector<8x384xf32> to vector<8x128xf32>
    %106 = vector.extract_strided_slice %88 {offsets = [0, 256], sizes = [8, 128], strides = [1, 1]} : vector<8x384xf32> to vector<8x128xf32>
    %107 = arith.mulf %96, %106 : vector<8x128xf32>
    %108 = arith.addf %105, %107 : vector<8x128xf32>
    %109 = math.tanh %108 : vector<8x128xf32>
    %cst_31 = arith.constant 1.000000e+00 : f32
    %110 = vector.broadcast %cst_31 : f32 to vector<8x128xf32>
    %111 = arith.subf %110, %104 : vector<8x128xf32>
    %112 = arith.mulf %111, %109 : vector<8x128xf32>
    %113 = arith.mulf %104, %82 : vector<8x128xf32>
    %114 = arith.addf %112, %113 : vector<8x128xf32>
    %c3_i32 = arith.constant 3 : i32
    %c8_i32_32 = arith.constant 8 : i32
    %115 = arith.muli %c3_i32, %c8_i32_32 : i32
    %116 = tpu.assume_multiple %115, 8 : i32
    %117 = arith.index_cast %116 : i32 to index
    %c0_33 = arith.constant 0 : index
    %118 = vector.load %arg7[%117, %c0_33] : memref<64x384xf32, #tpu.memory_space<vmem>>, vector<8x384xf32>
    %cst_34 = arith.constant dense<0.000000e+00> : vector<8x384xf32>
    %119 = tpu.matmul %114, %14, %cst_34 {dimension_numbers = #tpu.dot_dimension_numbers<[1], [0], [0], [1], [0, 0, 1, 1], [], []>} : vector<8x128xf32>, vector<128x384xf32>, vector<8x384xf32> -> vector<8x384xf32>
    %120 = arith.addf %119, %17 : vector<8x384xf32>
    %121 = vector.extract_strided_slice %118 {offsets = [0, 0], sizes = [8, 128], strides = [1, 1]} : vector<8x384xf32> to vector<8x128xf32>
    %122 = vector.extract_strided_slice %120 {offsets = [0, 0], sizes = [8, 128], strides = [1, 1]} : vector<8x384xf32> to vector<8x128xf32>
    %123 = arith.addf %121, %122 : vector<8x128xf32>
    %124 = arith.negf %123 : vector<8x128xf32>
    %125 = math.exp %124 : vector<8x128xf32>
    %cst_35 = arith.constant 1.000000e+00 : f32
    %126 = vector.broadcast %cst_35 : f32 to vector<8x128xf32>
    %127 = arith.addf %126, %125 : vector<8x128xf32>
    %128 = arith.divf %126, %127 : vector<8x128xf32>
    %129 = vector.extract_strided_slice %118 {offsets = [0, 128], sizes = [8, 128], strides = [1, 1]} : vector<8x384xf32> to vector<8x128xf32>
    %130 = vector.extract_strided_slice %120 {offsets = [0, 128], sizes = [8, 128], strides = [1, 1]} : vector<8x384xf32> to vector<8x128xf32>
    %131 = arith.addf %129, %130 : vector<8x128xf32>
    %132 = arith.negf %131 : vector<8x128xf32>
    %133 = math.exp %132 : vector<8x128xf32>
    %cst_36 = arith.constant 1.000000e+00 : f32
    %134 = vector.broadcast %cst_36 : f32 to vector<8x128xf32>
    %135 = arith.addf %134, %133 : vector<8x128xf32>
    %136 = arith.divf %134, %135 : vector<8x128xf32>
    %137 = vector.extract_strided_slice %118 {offsets = [0, 256], sizes = [8, 128], strides = [1, 1]} : vector<8x384xf32> to vector<8x128xf32>
    %138 = vector.extract_strided_slice %120 {offsets = [0, 256], sizes = [8, 128], strides = [1, 1]} : vector<8x384xf32> to vector<8x128xf32>
    %139 = arith.mulf %128, %138 : vector<8x128xf32>
    %140 = arith.addf %137, %139 : vector<8x128xf32>
    %141 = math.tanh %140 : vector<8x128xf32>
    %cst_37 = arith.constant 1.000000e+00 : f32
    %142 = vector.broadcast %cst_37 : f32 to vector<8x128xf32>
    %143 = arith.subf %142, %136 : vector<8x128xf32>
    %144 = arith.mulf %143, %141 : vector<8x128xf32>
    %145 = arith.mulf %136, %114 : vector<8x128xf32>
    %146 = arith.addf %144, %145 : vector<8x128xf32>
    %c4_i32 = arith.constant 4 : i32
    %c8_i32_38 = arith.constant 8 : i32
    %147 = arith.muli %c4_i32, %c8_i32_38 : i32
    %148 = tpu.assume_multiple %147, 8 : i32
    %149 = arith.index_cast %148 : i32 to index
    %c0_39 = arith.constant 0 : index
    %150 = vector.load %arg7[%149, %c0_39] : memref<64x384xf32, #tpu.memory_space<vmem>>, vector<8x384xf32>
    %cst_40 = arith.constant dense<0.000000e+00> : vector<8x384xf32>
    %151 = tpu.matmul %146, %14, %cst_40 {dimension_numbers = #tpu.dot_dimension_numbers<[1], [0], [0], [1], [0, 0, 1, 1], [], []>} : vector<8x128xf32>, vector<128x384xf32>, vector<8x384xf32> -> vector<8x384xf32>
    %152 = arith.addf %151, %17 : vector<8x384xf32>
    %153 = vector.extract_strided_slice %150 {offsets = [0, 0], sizes = [8, 128], strides = [1, 1]} : vector<8x384xf32> to vector<8x128xf32>
    %154 = vector.extract_strided_slice %152 {offsets = [0, 0], sizes = [8, 128], strides = [1, 1]} : vector<8x384xf32> to vector<8x128xf32>
    %155 = arith.addf %153, %154 : vector<8x128xf32>
    %156 = arith.negf %155 : vector<8x128xf32>
    %157 = math.exp %156 : vector<8x128xf32>
    %cst_41 = arith.constant 1.000000e+00 : f32
    %158 = vector.broadcast %cst_41 : f32 to vector<8x128xf32>
    %159 = arith.addf %158, %157 : vector<8x128xf32>
    %160 = arith.divf %158, %159 : vector<8x128xf32>
    %161 = vector.extract_strided_slice %150 {offsets = [0, 128], sizes = [8, 128], strides = [1, 1]} : vector<8x384xf32> to vector<8x128xf32>
    %162 = vector.extract_strided_slice %152 {offsets = [0, 128], sizes = [8, 128], strides = [1, 1]} : vector<8x384xf32> to vector<8x128xf32>
    %163 = arith.addf %161, %162 : vector<8x128xf32>
    %164 = arith.negf %163 : vector<8x128xf32>
    %165 = math.exp %164 : vector<8x128xf32>
    %cst_42 = arith.constant 1.000000e+00 : f32
    %166 = vector.broadcast %cst_42 : f32 to vector<8x128xf32>
    %167 = arith.addf %166, %165 : vector<8x128xf32>
    %168 = arith.divf %166, %167 : vector<8x128xf32>
    %169 = vector.extract_strided_slice %150 {offsets = [0, 256], sizes = [8, 128], strides = [1, 1]} : vector<8x384xf32> to vector<8x128xf32>
    %170 = vector.extract_strided_slice %152 {offsets = [0, 256], sizes = [8, 128], strides = [1, 1]} : vector<8x384xf32> to vector<8x128xf32>
    %171 = arith.mulf %160, %170 : vector<8x128xf32>
    %172 = arith.addf %169, %171 : vector<8x128xf32>
    %173 = math.tanh %172 : vector<8x128xf32>
    %cst_43 = arith.constant 1.000000e+00 : f32
    %174 = vector.broadcast %cst_43 : f32 to vector<8x128xf32>
    %175 = arith.subf %174, %168 : vector<8x128xf32>
    %176 = arith.mulf %175, %173 : vector<8x128xf32>
    %177 = arith.mulf %168, %146 : vector<8x128xf32>
    %178 = arith.addf %176, %177 : vector<8x128xf32>
    %c5_i32 = arith.constant 5 : i32
    %c8_i32_44 = arith.constant 8 : i32
    %179 = arith.muli %c5_i32, %c8_i32_44 : i32
    %180 = tpu.assume_multiple %179, 8 : i32
    %181 = arith.index_cast %180 : i32 to index
    %c0_45 = arith.constant 0 : index
    %182 = vector.load %arg7[%181, %c0_45] : memref<64x384xf32, #tpu.memory_space<vmem>>, vector<8x384xf32>
    %cst_46 = arith.constant dense<0.000000e+00> : vector<8x384xf32>
    %183 = tpu.matmul %178, %14, %cst_46 {dimension_numbers = #tpu.dot_dimension_numbers<[1], [0], [0], [1], [0, 0, 1, 1], [], []>} : vector<8x128xf32>, vector<128x384xf32>, vector<8x384xf32> -> vector<8x384xf32>
    %184 = arith.addf %183, %17 : vector<8x384xf32>
    %185 = vector.extract_strided_slice %182 {offsets = [0, 0], sizes = [8, 128], strides = [1, 1]} : vector<8x384xf32> to vector<8x128xf32>
    %186 = vector.extract_strided_slice %184 {offsets = [0, 0], sizes = [8, 128], strides = [1, 1]} : vector<8x384xf32> to vector<8x128xf32>
    %187 = arith.addf %185, %186 : vector<8x128xf32>
    %188 = arith.negf %187 : vector<8x128xf32>
    %189 = math.exp %188 : vector<8x128xf32>
    %cst_47 = arith.constant 1.000000e+00 : f32
    %190 = vector.broadcast %cst_47 : f32 to vector<8x128xf32>
    %191 = arith.addf %190, %189 : vector<8x128xf32>
    %192 = arith.divf %190, %191 : vector<8x128xf32>
    %193 = vector.extract_strided_slice %182 {offsets = [0, 128], sizes = [8, 128], strides = [1, 1]} : vector<8x384xf32> to vector<8x128xf32>
    %194 = vector.extract_strided_slice %184 {offsets = [0, 128], sizes = [8, 128], strides = [1, 1]} : vector<8x384xf32> to vector<8x128xf32>
    %195 = arith.addf %193, %194 : vector<8x128xf32>
    %196 = arith.negf %195 : vector<8x128xf32>
    %197 = math.exp %196 : vector<8x128xf32>
    %cst_48 = arith.constant 1.000000e+00 : f32
    %198 = vector.broadcast %cst_48 : f32 to vector<8x128xf32>
    %199 = arith.addf %198, %197 : vector<8x128xf32>
    %200 = arith.divf %198, %199 : vector<8x128xf32>
    %201 = vector.extract_strided_slice %182 {offsets = [0, 256], sizes = [8, 128], strides = [1, 1]} : vector<8x384xf32> to vector<8x128xf32>
    %202 = vector.extract_strided_slice %184 {offsets = [0, 256], sizes = [8, 128], strides = [1, 1]} : vector<8x384xf32> to vector<8x128xf32>
    %203 = arith.mulf %192, %202 : vector<8x128xf32>
    %204 = arith.addf %201, %203 : vector<8x128xf32>
    %205 = math.tanh %204 : vector<8x128xf32>
    %cst_49 = arith.constant 1.000000e+00 : f32
    %206 = vector.broadcast %cst_49 : f32 to vector<8x128xf32>
    %207 = arith.subf %206, %200 : vector<8x128xf32>
    %208 = arith.mulf %207, %205 : vector<8x128xf32>
    %209 = arith.mulf %200, %178 : vector<8x128xf32>
    %210 = arith.addf %208, %209 : vector<8x128xf32>
    %c6_i32 = arith.constant 6 : i32
    %c8_i32_50 = arith.constant 8 : i32
    %211 = arith.muli %c6_i32, %c8_i32_50 : i32
    %212 = tpu.assume_multiple %211, 8 : i32
    %213 = arith.index_cast %212 : i32 to index
    %c0_51 = arith.constant 0 : index
    %214 = vector.load %arg7[%213, %c0_51] : memref<64x384xf32, #tpu.memory_space<vmem>>, vector<8x384xf32>
    %cst_52 = arith.constant dense<0.000000e+00> : vector<8x384xf32>
    %215 = tpu.matmul %210, %14, %cst_52 {dimension_numbers = #tpu.dot_dimension_numbers<[1], [0], [0], [1], [0, 0, 1, 1], [], []>} : vector<8x128xf32>, vector<128x384xf32>, vector<8x384xf32> -> vector<8x384xf32>
    %216 = arith.addf %215, %17 : vector<8x384xf32>
    %217 = vector.extract_strided_slice %214 {offsets = [0, 0], sizes = [8, 128], strides = [1, 1]} : vector<8x384xf32> to vector<8x128xf32>
    %218 = vector.extract_strided_slice %216 {offsets = [0, 0], sizes = [8, 128], strides = [1, 1]} : vector<8x384xf32> to vector<8x128xf32>
    %219 = arith.addf %217, %218 : vector<8x128xf32>
    %220 = arith.negf %219 : vector<8x128xf32>
    %221 = math.exp %220 : vector<8x128xf32>
    %cst_53 = arith.constant 1.000000e+00 : f32
    %222 = vector.broadcast %cst_53 : f32 to vector<8x128xf32>
    %223 = arith.addf %222, %221 : vector<8x128xf32>
    %224 = arith.divf %222, %223 : vector<8x128xf32>
    %225 = vector.extract_strided_slice %214 {offsets = [0, 128], sizes = [8, 128], strides = [1, 1]} : vector<8x384xf32> to vector<8x128xf32>
    %226 = vector.extract_strided_slice %216 {offsets = [0, 128], sizes = [8, 128], strides = [1, 1]} : vector<8x384xf32> to vector<8x128xf32>
    %227 = arith.addf %225, %226 : vector<8x128xf32>
    %228 = arith.negf %227 : vector<8x128xf32>
    %229 = math.exp %228 : vector<8x128xf32>
    %cst_54 = arith.constant 1.000000e+00 : f32
    %230 = vector.broadcast %cst_54 : f32 to vector<8x128xf32>
    %231 = arith.addf %230, %229 : vector<8x128xf32>
    %232 = arith.divf %230, %231 : vector<8x128xf32>
    %233 = vector.extract_strided_slice %214 {offsets = [0, 256], sizes = [8, 128], strides = [1, 1]} : vector<8x384xf32> to vector<8x128xf32>
    %234 = vector.extract_strided_slice %216 {offsets = [0, 256], sizes = [8, 128], strides = [1, 1]} : vector<8x384xf32> to vector<8x128xf32>
    %235 = arith.mulf %224, %234 : vector<8x128xf32>
    %236 = arith.addf %233, %235 : vector<8x128xf32>
    %237 = math.tanh %236 : vector<8x128xf32>
    %cst_55 = arith.constant 1.000000e+00 : f32
    %238 = vector.broadcast %cst_55 : f32 to vector<8x128xf32>
    %239 = arith.subf %238, %232 : vector<8x128xf32>
    %240 = arith.mulf %239, %237 : vector<8x128xf32>
    %241 = arith.mulf %232, %210 : vector<8x128xf32>
    %242 = arith.addf %240, %241 : vector<8x128xf32>
    %c7_i32 = arith.constant 7 : i32
    %c8_i32_56 = arith.constant 8 : i32
    %243 = arith.muli %c7_i32, %c8_i32_56 : i32
    %244 = tpu.assume_multiple %243, 8 : i32
    %245 = arith.index_cast %244 : i32 to index
    %c0_57 = arith.constant 0 : index
    %246 = vector.load %arg7[%245, %c0_57] : memref<64x384xf32, #tpu.memory_space<vmem>>, vector<8x384xf32>
    %cst_58 = arith.constant dense<0.000000e+00> : vector<8x384xf32>
    %247 = tpu.matmul %242, %14, %cst_58 {dimension_numbers = #tpu.dot_dimension_numbers<[1], [0], [0], [1], [0, 0, 1, 1], [], []>} : vector<8x128xf32>, vector<128x384xf32>, vector<8x384xf32> -> vector<8x384xf32>
    %248 = arith.addf %247, %17 : vector<8x384xf32>
    %249 = vector.extract_strided_slice %246 {offsets = [0, 0], sizes = [8, 128], strides = [1, 1]} : vector<8x384xf32> to vector<8x128xf32>
    %250 = vector.extract_strided_slice %248 {offsets = [0, 0], sizes = [8, 128], strides = [1, 1]} : vector<8x384xf32> to vector<8x128xf32>
    %251 = arith.addf %249, %250 : vector<8x128xf32>
    %252 = arith.negf %251 : vector<8x128xf32>
    %253 = math.exp %252 : vector<8x128xf32>
    %cst_59 = arith.constant 1.000000e+00 : f32
    %254 = vector.broadcast %cst_59 : f32 to vector<8x128xf32>
    %255 = arith.addf %254, %253 : vector<8x128xf32>
    %256 = arith.divf %254, %255 : vector<8x128xf32>
    %257 = vector.extract_strided_slice %246 {offsets = [0, 128], sizes = [8, 128], strides = [1, 1]} : vector<8x384xf32> to vector<8x128xf32>
    %258 = vector.extract_strided_slice %248 {offsets = [0, 128], sizes = [8, 128], strides = [1, 1]} : vector<8x384xf32> to vector<8x128xf32>
    %259 = arith.addf %257, %258 : vector<8x128xf32>
    %260 = arith.negf %259 : vector<8x128xf32>
    %261 = math.exp %260 : vector<8x128xf32>
    %cst_60 = arith.constant 1.000000e+00 : f32
    %262 = vector.broadcast %cst_60 : f32 to vector<8x128xf32>
    %263 = arith.addf %262, %261 : vector<8x128xf32>
    %264 = arith.divf %262, %263 : vector<8x128xf32>
    %265 = vector.extract_strided_slice %246 {offsets = [0, 256], sizes = [8, 128], strides = [1, 1]} : vector<8x384xf32> to vector<8x128xf32>
    %266 = vector.extract_strided_slice %248 {offsets = [0, 256], sizes = [8, 128], strides = [1, 1]} : vector<8x384xf32> to vector<8x128xf32>
    %267 = arith.mulf %256, %266 : vector<8x128xf32>
    %268 = arith.addf %265, %267 : vector<8x128xf32>
    %269 = math.tanh %268 : vector<8x128xf32>
    %cst_61 = arith.constant 1.000000e+00 : f32
    %270 = vector.broadcast %cst_61 : f32 to vector<8x128xf32>
    %271 = arith.subf %270, %264 : vector<8x128xf32>
    %272 = arith.mulf %271, %269 : vector<8x128xf32>
    %273 = arith.mulf %264, %242 : vector<8x128xf32>
    %274 = arith.addf %272, %273 : vector<8x128xf32>
    %c8_i32_62 = arith.constant 8 : i32
    %c0_63 = arith.constant 0 : index
    %c0_64 = arith.constant 0 : index
    %275 = vector.load %arg6[%c0_63, %c0_64] : memref<8x128xf32, #tpu.memory_space<vmem>>, vector<8x128xf32>
    tpu.vector_store %arg6[%c0_63, %c0_64], %274 {strides = array<i32>} : memref<8x128xf32, #tpu.memory_space<vmem>>, vector<8x128xf32>,
    return
  }
}

</mosaic_0001>

<llo_original>
// kernel: tpu_custom_call.1
$region0: #{tpu_custom_call.1}
  #allocation0 [shape = 'u32[]', space=smem, size = 0x4, offset = 0x4, fixed_abs, tag = 'smem constant byte address 0x4 - core index']
  #allocation1 [shape = 'u32[144,128]{1,0:T(1,128)}', space=vmem, size = 0x12000, scoped, tag = 'internal scratch']
  #allocation2 [shape = 'f32[64,384]{1,0:T(8,128)}', space=vmem, size = 0x18000, scoped, tag = 'scratch operand']
  %s0 = inlined_call_operand.vmem [shape: s32[64,1], index: 0, kind: input, shape index: {}]
  %s1 = inlined_call_operand.hbm [shape: f32[128,128], index: 1, kind: input, shape index: {}]
  %s2 = inlined_call_operand.hbm [shape: f32[128,384], index: 2, kind: input, shape index: {}]
  %s3 = inlined_call_operand.hbm [shape: f32[128,384], index: 3, kind: input, shape index: {}]
  %s4 = inlined_call_operand.vmem [shape: f32[1,384], index: 4, kind: input, shape index: {}]
  %s5 = inlined_call_operand.vmem [shape: f32[1,384], index: 5, kind: input, shape index: {}]
  %s6 = inlined_call_operand.hbm [shape: f32[8,128], index: 6, kind: output, shape index: {}]
  %s7 = sld [smem:[#allocation0]]
  $region46: #{tpu_custom_call.1} parent=0
    _
  %s9 = ssub.s32 1, %s7
  %s10 = scalar_select 0, %s9, %s7
  $region1: #{tpu_custom_call.1} parent=0
    #allocation3 [shape = 'u8[65536]{0}', space=vmem, size = 0x10000, scoped, tag = 'input window, operand 1, single buffered']
    #allocation4 [shape = 's32[1]{0}', space=sflag, size = 0x4, scoped, tag = 'scoped memory for tpu_custom_call.1']
    #allocation5 [shape = 's32[1]{0}', space=sflag, size = 0x4, scoped, tag = 'scoped memory for tpu_custom_call.1']
    #allocation6 [shape = 'u8[196608]{0}', space=vmem, size = 0x30000, scoped, tag = 'input window, operand 2, single buffered']
    #allocation7 [shape = 's32[1]{0}', space=sflag, size = 0x4, scoped, tag = 'scoped memory for tpu_custom_call.1']
    #allocation8 [shape = 'u8[196608]{0}', space=vmem, size = 0x30000, scoped, tag = 'input window, operand 3, single buffered']
    #allocation9 [shape = 'u8[4096]{0}', space=vmem, size = 0x1000, scoped, tag = 'output window, operand 0, single buffered']
    %11 = vsyncpa [#allocation4], 0
    %12 = vsyncpa [#allocation7], 0
    %13 = vsyncpa [#allocation5], 0
    // Predicated region
    $region2: #{tpu_custom_call.1} parent=1 // pred_check
      _
    $region3: #{tpu_custom_call.1} parent=1 // pred_check_branch
      %15 = sbr.rel (0) target = $region5
    $region4: #{tpu_custom_call.1} parent=1 // pred_region
      _
    $region5: #{tpu_custom_call.1} parent=1 // pred_fallthru
      _
    // Predicated region
    $region6: #{tpu_custom_call.1} parent=1 // pred_check
      _
    $region7: #{tpu_custom_call.1} parent=1 // pred_check_branch
      %17 = sbr.rel (0) target = $region9
    $region8: #{tpu_custom_call.1} parent=1 // pred_region
      %s19 = ssub.s32 2048, 2048
      %20 = vsyncadd [#allocation4], %s19
      %s21 = sshll.u32 [#allocation3], 4
      %s22 = int_to_ptr.vmem [resolvable:$true] %s21
      %27 = dma.hbm_to_vmem [thread:$0]  %s1, 2048, %s22, [#allocation4], 128, 128, 8
    $region9: #{tpu_custom_call.1} parent=1 // pred_fallthru
      _
    // Predicated region
    $region10: #{tpu_custom_call.1} parent=1 // pred_check
      _
    $region11: #{tpu_custom_call.1} parent=1 // pred_check_branch
      %29 = sbr.rel (0) target = $region13
    $region12: #{tpu_custom_call.1} parent=1 // pred_region
      %s31 = ssub.s32 6144, 6144
      %32 = vsyncadd [#allocation7], %s31
      %s33 = sshll.u32 [#allocation6], 4
      %s34 = int_to_ptr.vmem [resolvable:$true] %s33
      %39 = dma.hbm_to_vmem [thread:$0]  %s2, 6144, %s34, [#allocation7], 384, 384, 24
    $region13: #{tpu_custom_call.1} parent=1 // pred_fallthru
      _
    // Predicated region
    $region14: #{tpu_custom_call.1} parent=1 // pred_check
      _
    $region15: #{tpu_custom_call.1} parent=1 // pred_check_branch
      %41 = sbr.rel (0) target = $region17
    $region16: #{tpu_custom_call.1} parent=1 // pred_region
      %s43 = ssub.s32 6144, 6144
      %44 = vsyncadd [#allocation7], %s43
      %s45 = sshll.u32 [#allocation8], 4
      %s46 = int_to_ptr.vmem [resolvable:$true] %s45
      %51 = dma.hbm_to_vmem [thread:$0]  %s3, 6144, %s46, [#allocation7], 384, 384, 24
    $region17: #{tpu_custom_call.1} parent=1 // pred_fallthru
      _
    // Predicated region
    $region18: #{tpu_custom_call.1} parent=1 // pred_check
      _
    $region19: #{tpu_custom_call.1} parent=1 // pred_check_branch
      %53 = sbr.rel (0) target = $region21
    $region20: #{tpu_custom_call.1} parent=1 // pred_region
      _
    $region21: #{tpu_custom_call.1} parent=1 // pred_fallthru
      _
    // Predicated region
    $region22: #{tpu_custom_call.1} parent=1 // pred_check
      _
    $region23: #{tpu_custom_call.1} parent=1 // pred_check_branch
      %55 = sbr.rel (0) target = $region25
    $region24: #{tpu_custom_call.1} parent=1 // pred_region
      _
    $region25: #{tpu_custom_call.1} parent=1 // pred_fallthru
      _
    // Predicated region
    $region26: #{tpu_custom_call.1} parent=1 // pred_check
      _
    $region27: #{tpu_custom_call.1} parent=1 // pred_check_branch
      %57 = sbr.rel (0) target = $region29
    $region28: #{tpu_custom_call.1} parent=1 // pred_region
      %58 = dma.done [#allocation4], 2048
    $region29: #{tpu_custom_call.1} parent=1 // pred_fallthru
      _
    // Predicated region
    $region30: #{tpu_custom_call.1} parent=1 // pred_check
      _
    $region31: #{tpu_custom_call.1} parent=1 // pred_check_branch
      %60 = sbr.rel (0) target = $region33
    $region32: #{tpu_custom_call.1} parent=1 // pred_region
      %61 = dma.done [#allocation7], 6144
    $region33: #{tpu_custom_call.1} parent=1 // pred_fallthru
      _
    // Predicated region
    $region34: #{tpu_custom_call.1} parent=1 // pred_check
      _
    $region35: #{tpu_custom_call.1} parent=1 // pred_check_branch
      %63 = sbr.rel (0) target = $region37
    $region36: #{tpu_custom_call.1} parent=1 // pred_region
      %64 = dma.done [#allocation7], 6144
    $region37: #{tpu_custom_call.1} parent=1 // pred_fallthru
      _
    %v65 = vld [vmem:[%s0] sm:$0xff]
    %v66 = vld [vmem:[%s0 + $0x8] sm:$0xff]
    %v67 = vld [vmem:[%s0 + $0x10] sm:$0xff]
    %v68 = vld [vmem:[%s0 + $0x18] sm:$0xff]
    %v69 = vld [vmem:[%s0 + $0x20] sm:$0xff]
    %v70 = vld [vmem:[%s0 + $0x28] sm:$0xff]
    %v71 = vld [vmem:[%s0 + $0x30] sm:$0xff]
    %v72 = vld [vmem:[%s0 + $0x38] sm:$0xff]
    %v73 = vlaneseq
    %v74 = vand.u32 %v73, 127
    %75 = vset.pattern.permute.xlu0 0
    %76 = vperm.xlu0 %75, %v65
    %v77 = vpop.permute.xlu0 %76
    %78 = vset.pattern.permute.xlu0 0
    %79 = vperm.xlu0 %78, %v66
    %v80 = vpop.permute.xlu0 %79
    %81 = vset.pattern.permute.xlu0 0
    %82 = vperm.xlu0 %81, %v67
    %v83 = vpop.permute.xlu0 %82
    %84 = vset.pattern.permute.xlu0 0
    %85 = vperm.xlu0 %84, %v68
    %v86 = vpop.permute.xlu0 %85
    %87 = vset.pattern.permute.xlu0 0
    %88 = vperm.xlu0 %87, %v69
    %v89 = vpop.permute.xlu0 %88
    %90 = vset.pattern.permute.xlu0 0
    %91 = vperm.xlu0 %90, %v70
    %v92 = vpop.permute.xlu0 %91
    %93 = vset.pattern.permute.xlu0 0
    %94 = vperm.xlu0 %93, %v71
    %v95 = vpop.permute.xlu0 %94
    %96 = vset.pattern.permute.xlu0 0
    %97 = vperm.xlu0 %96, %v72
    %v98 = vpop.permute.xlu0 %97
    %vm99 = vcmp.eq.s32.totalorder %v77, %v74
    %vm100 = vcmp.eq.s32.totalorder %v80, %v74
    %vm101 = vcmp.eq.s32.totalorder %v83, %v74
    %vm102 = vcmp.eq.s32.totalorder %v86, %v74
    %vm103 = vcmp.eq.s32.totalorder %v89, %v74
    %vm104 = vcmp.eq.s32.totalorder %v92, %v74
    %vm105 = vcmp.eq.s32.totalorder %v95, %v74
    %vm106 = vcmp.eq.s32.totalorder %v98, %v74
    %v107 = vsel %vm99, 1, 0
    %v108 = vsel %vm100, 1, 0
    %v109 = vsel %vm101, 1, 0
    %v110 = vsel %vm102, 1, 0
    %v111 = vsel %vm103, 1, 0
    %v112 = vsel %vm104, 1, 0
    %v113 = vsel %vm105, 1, 0
    %v114 = vsel %vm106, 1, 0
    %v115 = vcvt.s32.f32 %v107
    %v116 = vcvt.s32.f32 %v108
    %v117 = vcvt.s32.f32 %v109
    %v118 = vcvt.s32.f32 %v110
    %v119 = vcvt.s32.f32 %v111
    %v120 = vcvt.s32.f32 %v112
    %v121 = vcvt.s32.f32 %v113
    %v122 = vcvt.s32.f32 %v114
    %v123 = vld [vmem:[#allocation3] sm:$0xff]
    %v124 = vld [vmem:[#allocation3 + $0x8] sm:$0xff]
    %v125 = vld [vmem:[#allocation3 + $0x10] sm:$0xff]
    %v126 = vld [vmem:[#allocation3 + $0x18] sm:$0xff]
    %v127 = vld [vmem:[#allocation3 + $0x20] sm:$0xff]
    %v128 = vld [vmem:[#allocation3 + $0x28] sm:$0xff]
    %v129 = vld [vmem:[#allocation3 + $0x30] sm:$0xff]
    %v130 = vld [vmem:[#allocation3 + $0x38] sm:$0xff]
    %v131 = vld [vmem:[#allocation3 + $0x40] sm:$0xff]
    %v132 = vld [vmem:[#allocation3 + $0x48] sm:$0xff]
    %v133 = vld [vmem:[#allocation3 + $0x50] sm:$0xff]
    %v134 = vld [vmem:[#allocation3 + $0x58] sm:$0xff]
    %v135 = vld [vmem:[#allocation3 + $0x60] sm:$0xff]
    %v136 = vld [vmem:[#allocation3 + $0x68] sm:$0xff]
    %v137 = vld [vmem:[#allocation3 + $0x70] sm:$0xff]
    %v138 = vld [vmem:[#allocation3 + $0x78] sm:$0xff]
    %139 = vmatprep.subr.mxu0 0.0
    %140 = vmatpush1.msra.mxu0 %v138
    %141 = vmatprep.subr.mxu0 0.0
    %142 = vmatpush1.msra.mxu0 %v137
    %143 = vmatprep.subr.mxu0 0.0
    %144 = vmatpush1.msra.mxu0 %v136
    %145 = vmatprep.subr.mxu0 0.0
    %146 = vmatpush1.msra.mxu0 %v135
    %147 = vmatprep.subr.mxu0 0.0
    %148 = vmatpush1.msra.mxu0 %v134
    %149 = vmatprep.subr.mxu0 0.0
    %150 = vmatpush1.msra.mxu0 %v133
    %151 = vmatprep.subr.mxu0 0.0
    %152 = vmatpush1.msra.mxu0 %v132
    %153 = vmatprep.subr.mxu0 0.0
    %154 = vmatpush1.msra.mxu0 %v131
    %155 = vmatprep.subr.mxu0 0.0
    %156 = vmatpush1.msra.mxu0 %v130
    %157 = vmatprep.subr.mxu0 0.0
    %158 = vmatpush1.msra.mxu0 %v129
    %159 = vmatprep.subr.mxu0 0.0
    %160 = vmatpush1.msra.mxu0 %v128
    %161 = vmatprep.subr.mxu0 0.0
    %162 = vmatpush1.msra.mxu0 %v127
    %163 = vmatprep.subr.mxu0 0.0
    %164 = vmatpush1.msra.mxu0 %v126
    %165 = vmatprep.subr.mxu0 0.0
    %166 = vmatpush1.msra.mxu0 %v125
    %167 = vmatprep.subr.mxu0 0.0
    %168 = vmatpush1.msra.mxu0 %v124
    %169 = vmatprep.subr.mxu0 0.0
    %170 = vmatpush1.msra.mxu0 %v123
    %171 = vmatprep.subr.mxu0 0.0
    %172 = vmatpush2.msra.mxu0 0.0
    %173 = vmatprep.subr.mxu0 0.0
    %174 = vmatpush2.msra.mxu0 0.0
    %175 = vmatprep.subr.mxu0 0.0
    %176 = vmatpush2.msra.mxu0 0.0
    %177 = vmatprep.subr.mxu0 0.0
    %178 = vmatpush2.msra.mxu0 0.0
    %179 = vmatprep.subr.mxu0 0.0
    %180 = vmatpush2.msra.mxu0 0.0
    %181 = vmatprep.subr.mxu0 0.0
    %182 = vmatpush2.msra.mxu0 0.0
    %183 = vmatprep.subr.mxu0 0.0
    %184 = vmatpush2.msra.mxu0 0.0
    %185 = vmatprep.subr.mxu0 0.0
    %186 = vmatpush2.msra.mxu0 0.0
    %187 = vmatprep.subr.mxu0 0.0
    %188 = vmatpush2.msra.mxu0 0.0
    %189 = vmatprep.subr.mxu0 0.0
    %190 = vmatpush2.msra.mxu0 0.0
    %191 = vmatprep.subr.mxu0 0.0
    %192 = vmatpush2.msra.mxu0 0.0
    %193 = vmatprep.subr.mxu0 0.0
    %194 = vmatpush2.msra.mxu0 0.0
    %195 = vmatprep.subr.mxu0 0.0
    %196 = vmatpush2.msra.mxu0 0.0
    %197 = vmatprep.subr.mxu0 0.0
    %198 = vmatpush2.msra.mxu0 0.0
    %199 = vmatprep.subr.mxu0 0.0
    %200 = vmatpush2.msra.mxu0 0.0
    %201 = vmatprep.subr.mxu0 0.0
    %202 = vmatpush2.msra.mxu0 0.0
    %203 = vmatprep.mubr.f32.mxu0 0.0
    %204 = vmatmul.mubr.f32.gmra.mxu0 %v115
    %v205 = vpop.f32.mrf.mxu0
    %v206 = vadd.f32 0.0, %v205
    %v207 = vpop.f32.mrf.mxu0
    %208 = vmatprep.mubr.f32.mxu0 0.0
    %209 = vmatmul.mubr.f32.gmra.mxu0 %v116
    %v210 = vpop.f32.mrf.mxu0
    %v211 = vadd.f32 0.0, %v210
    %v212 = vpop.f32.mrf.mxu0
    %213 = vmatprep.mubr.f32.mxu0 0.0
    %214 = vmatmul.mubr.f32.gmra.mxu0 %v117
    %v215 = vpop.f32.mrf.mxu0
    %v216 = vadd.f32 0.0, %v215
    %v217 = vpop.f32.mrf.mxu0
    %218 = vmatprep.mubr.f32.mxu0 0.0
    %219 = vmatmul.mubr.f32.gmra.mxu0 %v118
    %v220 = vpop.f32.mrf.mxu0
    %v221 = vadd.f32 0.0, %v220
    %v222 = vpop.f32.mrf.mxu0
    %223 = vmatprep.mubr.f32.mxu0 0.0
    %224 = vmatmul.mubr.f32.gmra.mxu0 %v119
    %v225 = vpop.f32.mrf.mxu0
    %v226 = vadd.f32 0.0, %v225
    %v227 = vpop.f32.mrf.mxu0
    %228 = vmatprep.mubr.f32.mxu0 0.0
    %229 = vmatmul.mubr.f32.gmra.mxu0 %v120
    %v230 = vpop.f32.mrf.mxu0
    %v231 = vadd.f32 0.0, %v230
    %v232 = vpop.f32.mrf.mxu0
    %233 = vmatprep.mubr.f32.mxu0 0.0
    %234 = vmatmul.mubr.f32.gmra.mxu0 %v121
    %v235 = vpop.f32.mrf.mxu0
    %v236 = vadd.f32 0.0, %v235
    %v237 = vpop.f32.mrf.mxu0
    %238 = vmatprep.mubr.f32.mxu0 0.0
    %239 = vmatmul.mubr.f32.gmra.mxu0 %v122
    %v240 = vpop.f32.mrf.mxu0
    %v241 = vadd.f32 0.0, %v240
    %v242 = vpop.f32.mrf.mxu0
    %243 = vdwg.mxu0
    %v244 = vld [vmem:[#allocation6] sm:$0xff]
    %v245 = vld [vmem:[#allocation6 + $0x8] sm:$0xff]
    %v246 = vld [vmem:[#allocation6 + $0x10] sm:$0xff]
    %v247 = vld [vmem:[#allocation6 + $0x18] sm:$0xff]
    %v248 = vld [vmem:[#allocation6 + $0x20] sm:$0xff]
    %v249 = vld [vmem:[#allocation6 + $0x28] sm:$0xff]
    %v250 = vld [vmem:[#allocation6 + $0x30] sm:$0xff]
    %v251 = vld [vmem:[#allocation6 + $0x38] sm:$0xff]
    %v252 = vld [vmem:[#allocation6 + $0x40] sm:$0xff]
    %v253 = vld [vmem:[#allocation6 + $0x48] sm:$0xff]
    %v254 = vld [vmem:[#allocation6 + $0x50] sm:$0xff]
    %v255 = vld [vmem:[#allocation6 + $0x58] sm:$0xff]
    %v256 = vld [vmem:[#allocation6 + $0x60] sm:$0xff]
    %v257 = vld [vmem:[#allocation6 + $0x68] sm:$0xff]
    %v258 = vld [vmem:[#allocation6 + $0x70] sm:$0xff]
    %v259 = vld [vmem:[#allocation6 + $0x78] sm:$0xff]
    %v260 = vld [vmem:[#allocation6 + $0x80] sm:$0xff]
    %v261 = vld [vmem:[#allocation6 + $0x88] sm:$0xff]
    %v262 = vld [vmem:[#allocation6 + $0x90] sm:$0xff]
    %v263 = vld [vmem:[#allocation6 + $0x98] sm:$0xff]
    %v264 = vld [vmem:[#allocation6 + $0xa0] sm:$0xff]
    %v265 = vld [vmem:[#allocation6 + $0xa8] sm:$0xff]
    %v266 = vld [vmem:[#allocation6 + $0xb0] sm:$0xff]
    %v267 = vld [vmem:[#allocation6 + $0xb8] sm:$0xff]
    %v268 = vld [vmem:[#allocation6 + $0xc0] sm:$0xff]
    %v269 = vld [vmem:[#allocation6 + $0xc8] sm:$0xff]
    %v270 = vld [vmem:[#allocation6 + $0xd0] sm:$0xff]
    %v271 = vld [vmem:[#allocation6 + $0xd8] sm:$0xff]
    %v272 = vld [vmem:[#allocation6 + $0xe0] sm:$0xff]
    %v273 = vld [vmem:[#allocation6 + $0xe8] sm:$0xff]
    %v274 = vld [vmem:[#allocation6 + $0xf0] sm:$0xff]
    %v275 = vld [vmem:[#allocation6 + $0xf8] sm:$0xff]
    %v276 = vld [vmem:[#allocation6 + $0x100] sm:$0xff]
    %v277 = vld [vmem:[#allocation6 + $0x108] sm:$0xff]
    %v278 = vld [vmem:[#allocation6 + $0x110] sm:$0xff]
    %v279 = vld [vmem:[#allocation6 + $0x118] sm:$0xff]
    %v280 = vld [vmem:[#allocation6 + $0x120] sm:$0xff]
    %v281 = vld [vmem:[#allocation6 + $0x128] sm:$0xff]
    %v282 = vld [vmem:[#allocation6 + $0x130] sm:$0xff]
    %v283 = vld [vmem:[#allocation6 + $0x138] sm:$0xff]
    %v284 = vld [vmem:[#allocation6 + $0x140] sm:$0xff]
    %v285 = vld [vmem:[#allocation6 + $0x148] sm:$0xff]
    %v286 = vld [vmem:[#allocation6 + $0x150] sm:$0xff]
    %v287 = vld [vmem:[#allocation6 + $0x158] sm:$0xff]
    %v288 = vld [vmem:[#allocation6 + $0x160] sm:$0xff]
    %v289 = vld [vmem:[#allocation6 + $0x168] sm:$0xff]
    %v290 = vld [vmem:[#allocation6 + $0x170] sm:$0xff]
    %v291 = vld [vmem:[#allocation6 + $0x178] sm:$0xff]
    %v292 = vld [vmem:[%s4] sm:$0x7]
    %v294 = vlaneseq
    %v295 = vshrl.u32 %v294, 7
    %v296 = vsub.s32 0, %v295
    %v297 = vrot.slane %v292, %v296
    %v298 = vlaneseq
    %v299 = vshrl.u32 %v298, 7
    %v300 = vsub.s32 1, %v299
    %v301 = vrot.slane %v292, %v300
    %v302 = vlaneseq
    %v303 = vshrl.u32 %v302, 7
    %v304 = vsub.s32 2, %v303
    %v305 = vrot.slane %v292, %v304
    %309 = vmatprep.subr.mxu0 %v290
    %310 = vmatpush1.msra.mxu0 %v289
    %311 = vmatprep.subr.mxu0 %v287
    %312 = vmatpush1.msra.mxu0 %v286
    %313 = vmatprep.subr.mxu0 %v284
    %314 = vmatpush1.msra.mxu0 %v283
    %315 = vmatprep.subr.mxu0 %v281
    %316 = vmatpush1.msra.mxu0 %v280
    %317 = vmatprep.subr.mxu0 %v278
    %318 = vmatpush1.msra.mxu0 %v277
    %319 = vmatprep.subr.mxu0 %v275
    %320 = vmatpush1.msra.mxu0 %v274
    %321 = vmatprep.subr.mxu0 %v272
    %322 = vmatpush1.msra.mxu0 %v271
    %323 = vmatprep.subr.mxu0 %v269
    %324 = vmatpush1.msra.mxu0 %v268
    %325 = vmatprep.subr.mxu0 %v266
    %326 = vmatpush1.msra.mxu0 %v265
    %327 = vmatprep.subr.mxu0 %v263
    %328 = vmatpush1.msra.mxu0 %v262
    %329 = vmatprep.subr.mxu0 %v260
    %330 = vmatpush1.msra.mxu0 %v259
    %331 = vmatprep.subr.mxu0 %v257
    %332 = vmatpush1.msra.mxu0 %v256
    %333 = vmatprep.subr.mxu0 %v254
    %334 = vmatpush1.msra.mxu0 %v253
    %335 = vmatprep.subr.mxu0 %v251
    %336 = vmatpush1.msra.mxu0 %v250
    %337 = vmatprep.subr.mxu0 %v248
    %338 = vmatpush1.msra.mxu0 %v247
    %339 = vmatprep.subr.mxu0 %v245
    %340 = vmatpush1.msra.mxu0 %v244
    %341 = vmatprep.subr.mxu0 0.0
    %342 = vmatpush2.msra.mxu0 0.0
    %343 = vmatprep.subr.mxu0 0.0
    %344 = vmatpush2.msra.mxu0 0.0
    %345 = vmatprep.subr.mxu0 0.0
    %346 = vmatpush2.msra.mxu0 0.0
    %347 = vmatprep.subr.mxu0 0.0
    %348 = vmatpush2.msra.mxu0 0.0
    %349 = vmatprep.subr.mxu0 0.0
    %350 = vmatpush2.msra.mxu0 0.0
    %351 = vmatprep.subr.mxu0 0.0
    %352 = vmatpush2.msra.mxu0 0.0
    %353 = vmatprep.subr.mxu0 0.0
    %354 = vmatpush2.msra.mxu0 0.0
    %355 = vmatprep.subr.mxu0 0.0
    %356 = vmatpush2.msra.mxu0 0.0
    %357 = vmatprep.subr.mxu0 0.0
    %358 = vmatpush2.msra.mxu0 0.0
    %359 = vmatprep.subr.mxu0 0.0
    %360 = vmatpush2.msra.mxu0 0.0
    %361 = vmatprep.subr.mxu0 0.0
    %362 = vmatpush2.msra.mxu0 0.0
    %363 = vmatprep.subr.mxu0 0.0
    %364 = vmatpush2.msra.mxu0 0.0
    %365 = vmatprep.subr.mxu0 0.0
    %366 = vmatpush2.msra.mxu0 0.0
    %367 = vmatprep.subr.mxu0 0.0
    %368 = vmatpush2.msra.mxu0 0.0
    %369 = vmatprep.subr.mxu0 0.0
    %370 = vmatpush2.msra.mxu0 0.0
    %371 = vmatprep.subr.mxu0 0.0
    %372 = vmatpush2.msra.mxu0 0.0
    %373 = vmatprep.mubr.f32.mxu0 0.0
    %374 = vmatmul.mubr.f32.gmra.mxu0 %v206
    %v375 = vpop.f32.mrf.mxu0
    %v376 = vadd.f32 %v297, %v375
    %v377 = vpop.f32.mrf.mxu0
    %v378 = vadd.f32 %v301, %v377
    %379 = vmatprep.mubr.f32.mxu0 0.0
    %380 = vmatmul.mubr.f32.gmra.mxu0 %v211
    %v381 = vpop.f32.mrf.mxu0
    %v382 = vadd.f32 %v297, %v381
    %v383 = vpop.f32.mrf.mxu0
    %v384 = vadd.f32 %v301, %v383
    %385 = vmatprep.mubr.f32.mxu0 0.0
    %386 = vmatmul.mubr.f32.gmra.mxu0 %v216
    %v387 = vpop.f32.mrf.mxu0
    %v388 = vadd.f32 %v297, %v387
    %v389 = vpop.f32.mrf.mxu0
    %v390 = vadd.f32 %v301, %v389
    %391 = vmatprep.mubr.f32.mxu0 0.0
    %392 = vmatmul.mubr.f32.gmra.mxu0 %v221
    %v393 = vpop.f32.mrf.mxu0
    %v394 = vadd.f32 %v297, %v393
    %v395 = vpop.f32.mrf.mxu0
    %v396 = vadd.f32 %v301, %v395
    %397 = vmatprep.mubr.f32.mxu0 0.0
    %398 = vmatmul.mubr.f32.gmra.mxu0 %v226
    %v399 = vpop.f32.mrf.mxu0
    %v400 = vadd.f32 %v297, %v399
    %v401 = vpop.f32.mrf.mxu0
    %v402 = vadd.f32 %v301, %v401
    %403 = vmatprep.mubr.f32.mxu0 0.0
    %404 = vmatmul.mubr.f32.gmra.mxu0 %v231
    %v405 = vpop.f32.mrf.mxu0
    %v406 = vadd.f32 %v297, %v405
    %v407 = vpop.f32.mrf.mxu0
    %v408 = vadd.f32 %v301, %v407
    %409 = vmatprep.mubr.f32.mxu0 0.0
    %410 = vmatmul.mubr.f32.gmra.mxu0 %v236
    %v411 = vpop.f32.mrf.mxu0
    %v412 = vadd.f32 %v297, %v411
    %v413 = vpop.f32.mrf.mxu0
    %v414 = vadd.f32 %v301, %v413
    %415 = vmatprep.mubr.f32.mxu0 0.0
    %416 = vmatmul.mubr.f32.gmra.mxu0 %v241
    %v417 = vpop.f32.mrf.mxu0
    %v418 = vadd.f32 %v297, %v417
    %v419 = vpop.f32.mrf.mxu0
    %v420 = vadd.f32 %v301, %v419
    %421 = vdwg.mxu0
    %422 = vmatprep.subr.mxu0 0.0
    %423 = vmatpush1.msra.mxu0 %v291
    %424 = vmatprep.subr.mxu0 0.0
    %425 = vmatpush1.msra.mxu0 %v288
    %426 = vmatprep.subr.mxu0 0.0
    %427 = vmatpush1.msra.mxu0 %v285
    %428 = vmatprep.subr.mxu0 0.0
    %429 = vmatpush1.msra.mxu0 %v282
    %430 = vmatprep.subr.mxu0 0.0
    %431 = vmatpush1.msra.mxu0 %v279
    %432 = vmatprep.subr.mxu0 0.0
    %433 = vmatpush1.msra.mxu0 %v276
    %434 = vmatprep.subr.mxu0 0.0
    %435 = vmatpush1.msra.mxu0 %v273
    %436 = vmatprep.subr.mxu0 0.0
    %437 = vmatpush1.msra.mxu0 %v270
    %438 = vmatprep.subr.mxu0 0.0
    %439 = vmatpush1.msra.mxu0 %v267
    %440 = vmatprep.subr.mxu0 0.0
    %441 = vmatpush1.msra.mxu0 %v264
    %442 = vmatprep.subr.mxu0 0.0
    %443 = vmatpush1.msra.mxu0 %v261
    %444 = vmatprep.subr.mxu0 0.0
    %445 = vmatpush1.msra.mxu0 %v258
    %446 = vmatprep.subr.mxu0 0.0
    %447 = vmatpush1.msra.mxu0 %v255
    %448 = vmatprep.subr.mxu0 0.0
    %449 = vmatpush1.msra.mxu0 %v252
    %450 = vmatprep.subr.mxu0 0.0
    %451 = vmatpush1.msra.mxu0 %v249
    %452 = vmatprep.subr.mxu0 0.0
    %453 = vmatpush1.msra.mxu0 %v246
    %454 = vmatprep.subr.mxu0 0.0
    %455 = vmatpush2.msra.mxu0 0.0
    %456 = vmatprep.subr.mxu0 0.0
    %457 = vmatpush2.msra.mxu0 0.0
    %458 = vmatprep.subr.mxu0 0.0
    %459 = vmatpush2.msra.mxu0 0.0
    %460 = vmatprep.subr.mxu0 0.0
    %461 = vmatpush2.msra.mxu0 0.0
    %462 = vmatprep.subr.mxu0 0.0
    %463 = vmatpush2.msra.mxu0 0.0
    %464 = vmatprep.subr.mxu0 0.0
    %465 = vmatpush2.msra.mxu0 0.0
    %466 = vmatprep.subr.mxu0 0.0
    %467 = vmatpush2.msra.mxu0 0.0
    %468 = vmatprep.subr.mxu0 0.0
    %469 = vmatpush2.msra.mxu0 0.0
    %470 = vmatprep.subr.mxu0 0.0
    %471 = vmatpush2.msra.mxu0 0.0
    %472 = vmatprep.subr.mxu0 0.0
    %473 = vmatpush2.msra.mxu0 0.0
    %474 = vmatprep.subr.mxu0 0.0
    %475 = vmatpush2.msra.mxu0 0.0
    %476 = vmatprep.subr.mxu0 0.0
    %477 = vmatpush2.msra.mxu0 0.0
    %478 = vmatprep.subr.mxu0 0.0
    %479 = vmatpush2.msra.mxu0 0.0
    %480 = vmatprep.subr.mxu0 0.0
    %481 = vmatpush2.msra.mxu0 0.0
    %482 = vmatprep.subr.mxu0 0.0
    %483 = vmatpush2.msra.mxu0 0.0
    %484 = vmatprep.subr.mxu0 0.0
    %485 = vmatpush2.msra.mxu0 0.0
    %486 = vmatprep.mubr.f32.mxu0 0.0
    %487 = vmatmul.mubr.f32.gmra.mxu0 %v206
    %v488 = vpop.f32.mrf.mxu0
    %v489 = vadd.f32 %v305, %v488
    %v490 = vpop.f32.mrf.mxu0
    %491 = vmatprep.mubr.f32.mxu0 0.0
    %492 = vmatmul.mubr.f32.gmra.mxu0 %v211
    %v493 = vpop.f32.mrf.mxu0
    %v494 = vadd.f32 %v305, %v493
    %v495 = vpop.f32.mrf.mxu0
    %496 = vmatprep.mubr.f32.mxu0 0.0
    %497 = vmatmul.mubr.f32.gmra.mxu0 %v216
    %v498 = vpop.f32.mrf.mxu0
    %v499 = vadd.f32 %v305, %v498
    %v500 = vpop.f32.mrf.mxu0
    %501 = vmatprep.mubr.f32.mxu0 0.0
    %502 = vmatmul.mubr.f32.gmra.mxu0 %v221
    %v503 = vpop.f32.mrf.mxu0
    %v504 = vadd.f32 %v305, %v503
    %v505 = vpop.f32.mrf.mxu0
    %506 = vmatprep.mubr.f32.mxu0 0.0
    %507 = vmatmul.mubr.f32.gmra.mxu0 %v226
    %v508 = vpop.f32.mrf.mxu0
    %v509 = vadd.f32 %v305, %v508
    %v510 = vpop.f32.mrf.mxu0
    %511 = vmatprep.mubr.f32.mxu0 0.0
    %512 = vmatmul.mubr.f32.gmra.mxu0 %v231
    %v513 = vpop.f32.mrf.mxu0
    %v514 = vadd.f32 %v305, %v513
    %v515 = vpop.f32.mrf.mxu0
    %516 = vmatprep.mubr.f32.mxu0 0.0
    %517 = vmatmul.mubr.f32.gmra.mxu0 %v236
    %v518 = vpop.f32.mrf.mxu0
    %v519 = vadd.f32 %v305, %v518
    %v520 = vpop.f32.mrf.mxu0
    %521 = vmatprep.mubr.f32.mxu0 0.0
    %522 = vmatmul.mubr.f32.gmra.mxu0 %v241
    %v523 = vpop.f32.mrf.mxu0
    %v524 = vadd.f32 %v305, %v523
    %v525 = vpop.f32.mrf.mxu0
    %526 = vdwg.mxu0
    %527 = vst [vmem:[#allocation2] sm:$0xff] %v376
    %528 = vst [vmem:[#allocation2 + $0x8] sm:$0xff] %v378
    %529 = vst [vmem:[#allocation2 + $0x10] sm:$0xff] %v489
    %530 = vst [vmem:[#allocation2 + $0x18] sm:$0xff] %v382
    %531 = vst [vmem:[#allocation2 + $0x20] sm:$0xff] %v384
    %532 = vst [vmem:[#allocation2 + $0x28] sm:$0xff] %v494
    %533 = vst [vmem:[#allocation2 + $0x30] sm:$0xff] %v388
    %534 = vst [vmem:[#allocation2 + $0x38] sm:$0xff] %v390
    %535 = vst [vmem:[#allocation2 + $0x40] sm:$0xff] %v499
    %536 = vst [vmem:[#allocation2 + $0x48] sm:$0xff] %v394
    %537 = vst [vmem:[#allocation2 + $0x50] sm:$0xff] %v396
    %538 = vst [vmem:[#allocation2 + $0x58] sm:$0xff] %v504
    %539 = vst [vmem:[#allocation2 + $0x60] sm:$0xff] %v400
    %540 = vst [vmem:[#allocation2 + $0x68] sm:$0xff] %v402
    %541 = vst [vmem:[#allocation2 + $0x70] sm:$0xff] %v509
    %542 = vst [vmem:[#allocation2 + $0x78] sm:$0xff] %v406
    %543 = vst [vmem:[#allocation2 + $0x80] sm:$0xff] %v408
    %544 = vst [vmem:[#allocation2 + $0x88] sm:$0xff] %v514
    %545 = vst [vmem:[#allocation2 + $0x90] sm:$0xff] %v412
    %546 = vst [vmem:[#allocation2 + $0x98] sm:$0xff] %v414
    %547 = vst [vmem:[#allocation2 + $0xa0] sm:$0xff] %v519
    %548 = vst [vmem:[#allocation2 + $0xa8] sm:$0xff] %v418
    %549 = vst [vmem:[#allocation2 + $0xb0] sm:$0xff] %v420
    %550 = vst [vmem:[#allocation2 + $0xb8] sm:$0xff] %v524
    %v551 = vld [vmem:[#allocation8] sm:$0xff]
    %v552 = vld [vmem:[#allocation8 + $0x8] sm:$0xff]
    %v553 = vld [vmem:[#allocation8 + $0x10] sm:$0xff]
    %v554 = vld [vmem:[#allocation8 + $0x18] sm:$0xff]
    %v555 = vld [vmem:[#allocation8 + $0x20] sm:$0xff]
    %v556 = vld [vmem:[#allocation8 + $0x28] sm:$0xff]
    %v557 = vld [vmem:[#allocation8 + $0x30] sm:$0xff]
    %v558 = vld [vmem:[#allocation8 + $0x38] sm:$0xff]
    %v559 = vld [vmem:[#allocation8 + $0x40] sm:$0xff]
    %v560 = vld [vmem:[#allocation8 + $0x48] sm:$0xff]
    %v561 = vld [vmem:[#allocation8 + $0x50] sm:$0xff]
    %v562 = vld [vmem:[#allocation8 + $0x58] sm:$0xff]
    %v563 = vld [vmem:[#allocation8 + $0x60] sm:$0xff]
    %v564 = vld [vmem:[#allocation8 + $0x68] sm:$0xff]
    %v565 = vld [vmem:[#allocation8 + $0x70] sm:$0xff]
    %v566 = vld [vmem:[#allocation8 + $0x78] sm:$0xff]
    %v567 = vld [vmem:[#allocation8 + $0x80] sm:$0xff]
    %v568 = vld [vmem:[#allocation8 + $0x88] sm:$0xff]
    %v569 = vld [vmem:[#allocation8 + $0x90] sm:$0xff]
    %v570 = vld [vmem:[#allocation8 + $0x98] sm:$0xff]
    %v571 = vld [vmem:[#allocation8 + $0xa0] sm:$0xff]
    %v572 = vld [vmem:[#allocation8 + $0xa8] sm:$0xff]
    %v573 = vld [vmem:[#allocation8 + $0xb0] sm:$0xff]
    %v574 = vld [vmem:[#allocation8 + $0xb8] sm:$0xff]
    %v575 = vld [vmem:[#allocation8 + $0xc0] sm:$0xff]
    %v576 = vld [vmem:[#allocation8 + $0xc8] sm:$0xff]
    %v577 = vld [vmem:[#allocation8 + $0xd0] sm:$0xff]
    %v578 = vld [vmem:[#allocation8 + $0xd8] sm:$0xff]
    %v579 = vld [vmem:[#allocation8 + $0xe0] sm:$0xff]
    %v580 = vld [vmem:[#allocation8 + $0xe8] sm:$0xff]
    %v581 = vld [vmem:[#allocation8 + $0xf0] sm:$0xff]
    %v582 = vld [vmem:[#allocation8 + $0xf8] sm:$0xff]
    %v583 = vld [vmem:[#allocation8 + $0x100] sm:$0xff]
    %v584 = vld [vmem:[#allocation8 + $0x108] sm:$0xff]
    %v585 = vld [vmem:[#allocation8 + $0x110] sm:$0xff]
    %v586 = vld [vmem:[#allocation8 + $0x118] sm:$0xff]
    %v587 = vld [vmem:[#allocation8 + $0x120] sm:$0xff]
    %v588 = vld [vmem:[#allocation8 + $0x128] sm:$0xff]
    %v589 = vld [vmem:[#allocation8 + $0x130] sm:$0xff]
    %v590 = vld [vmem:[#allocation8 + $0x138] sm:$0xff]
    %v591 = vld [vmem:[#allocation8 + $0x140] sm:$0xff]
    %v592 = vld [vmem:[#allocation8 + $0x148] sm:$0xff]
    %v593 = vld [vmem:[#allocation8 + $0x150] sm:$0xff]
    %v594 = vld [vmem:[#allocation8 + $0x158] sm:$0xff]
    %v595 = vld [vmem:[#allocation8 + $0x160] sm:$0xff]
    %v596 = vld [vmem:[#allocation8 + $0x168] sm:$0xff]
    %v597 = vld [vmem:[#allocation8 + $0x170] sm:$0xff]
    %v598 = vld [vmem:[#allocation8 + $0x178] sm:$0xff]
    %v599 = vld [vmem:[%s5] sm:$0x7]
    %v601 = vlaneseq
    %v602 = vshrl.u32 %v601, 7
    %v603 = vsub.s32 0, %v602
    %v604 = vrot.slane %v599, %v603
    %v605 = vlaneseq
    %v606 = vshrl.u32 %v605, 7
    %v607 = vsub.s32 1, %v606
    %v608 = vrot.slane %v599, %v607
    %v609 = vlaneseq
    %v610 = vshrl.u32 %v609, 7
    %v611 = vsub.s32 2, %v610
    %v612 = vrot.slane %v599, %v611
    %s616 = smul.u32 0, 3
    %s617 = smul.addr %s616, 8
    %s618 = scalar_lea.vmem [#allocation2], %s617
    %v619 = vld [vmem:[%s618] sm:$0xff]
    %v620 = vld [vmem:[%s618 + $0x8] sm:$0xff]
    %v621 = vld [vmem:[%s618 + $0x10] sm:$0xff]
    %622 = vmatprep.subr.mxu0 %v597
    %623 = vmatpush1.msra.mxu0 %v596
    %624 = vmatprep.subr.mxu0 %v594
    %625 = vmatpush1.msra.mxu0 %v593
    %626 = vmatprep.subr.mxu0 %v591
    %627 = vmatpush1.msra.mxu0 %v590
    %628 = vmatprep.subr.mxu0 %v588
    %629 = vmatpush1.msra.mxu0 %v587
    %630 = vmatprep.subr.mxu0 %v585
    %631 = vmatpush1.msra.mxu0 %v584
    %632 = vmatprep.subr.mxu0 %v582
    %633 = vmatpush1.msra.mxu0 %v581
    %634 = vmatprep.subr.mxu0 %v579
    %635 = vmatpush1.msra.mxu0 %v578
    %636 = vmatprep.subr.mxu0 %v576
    %637 = vmatpush1.msra.mxu0 %v575
    %638 = vmatprep.subr.mxu0 %v573
    %639 = vmatpush1.msra.mxu0 %v572
    %640 = vmatprep.subr.mxu0 %v570
    %641 = vmatpush1.msra.mxu0 %v569
    %642 = vmatprep.subr.mxu0 %v567
    %643 = vmatpush1.msra.mxu0 %v566
    %644 = vmatprep.subr.mxu0 %v564
    %645 = vmatpush1.msra.mxu0 %v563
    %646 = vmatprep.subr.mxu0 %v561
    %647 = vmatpush1.msra.mxu0 %v560
    %648 = vmatprep.subr.mxu0 %v558
    %649 = vmatpush1.msra.mxu0 %v557
    %650 = vmatprep.subr.mxu0 %v555
    %651 = vmatpush1.msra.mxu0 %v554
    %652 = vmatprep.subr.mxu0 %v552
    %653 = vmatpush1.msra.mxu0 %v551
    %654 = vmatprep.subr.mxu0 0.0
    %655 = vmatpush2.msra.mxu0 0.0
    %656 = vmatprep.subr.mxu0 0.0
    %657 = vmatpush2.msra.mxu0 0.0
    %658 = vmatprep.subr.mxu0 0.0
    %659 = vmatpush2.msra.mxu0 0.0
    %660 = vmatprep.subr.mxu0 0.0
    %661 = vmatpush2.msra.mxu0 0.0
    %662 = vmatprep.subr.mxu0 0.0
    %663 = vmatpush2.msra.mxu0 0.0
    %664 = vmatprep.subr.mxu0 0.0
    %665 = vmatpush2.msra.mxu0 0.0
    %666 = vmatprep.subr.mxu0 0.0
    %667 = vmatpush2.msra.mxu0 0.0
    %668 = vmatprep.subr.mxu0 0.0
    %669 = vmatpush2.msra.mxu0 0.0
    %670 = vmatprep.subr.mxu0 0.0
    %671 = vmatpush2.msra.mxu0 0.0
    %672 = vmatprep.subr.mxu0 0.0
    %673 = vmatpush2.msra.mxu0 0.0
    %674 = vmatprep.subr.mxu0 0.0
    %675 = vmatpush2.msra.mxu0 0.0
    %676 = vmatprep.subr.mxu0 0.0
    %677 = vmatpush2.msra.mxu0 0.0
    %678 = vmatprep.subr.mxu0 0.0
    %679 = vmatpush2.msra.mxu0 0.0
    %680 = vmatprep.subr.mxu0 0.0
    %681 = vmatpush2.msra.mxu0 0.0
    %682 = vmatprep.subr.mxu0 0.0
    %683 = vmatpush2.msra.mxu0 0.0
    %684 = vmatprep.subr.mxu0 0.0
    %685 = vmatpush2.msra.mxu0 0.0
    %686 = vmatprep.mubr.f32.mxu0 0.0
    %687 = vmatmul.mubr.f32.gmra.mxu0 0.0
    %v688 = vpop.f32.mrf.mxu0
    %v689 = vadd.f32 %v604, %v688
    %v690 = vpop.f32.mrf.mxu0
    %v691 = vadd.f32 %v608, %v690
    %692 = vdwg.mxu0
    %693 = vmatprep.subr.mxu0 0.0
    %694 = vmatpush1.msra.mxu0 %v598
    %695 = vmatprep.subr.mxu0 0.0
    %696 = vmatpush1.msra.mxu0 %v595
    %697 = vmatprep.subr.mxu0 0.0
    %698 = vmatpush1.msra.mxu0 %v592
    %699 = vmatprep.subr.mxu0 0.0
    %700 = vmatpush1.msra.mxu0 %v589
    %701 = vmatprep.subr.mxu0 0.0
    %702 = vmatpush1.msra.mxu0 %v586
    %703 = vmatprep.subr.mxu0 0.0
    %704 = vmatpush1.msra.mxu0 %v583
    %705 = vmatprep.subr.mxu0 0.0
    %706 = vmatpush1.msra.mxu0 %v580
    %707 = vmatprep.subr.mxu0 0.0
    %708 = vmatpush1.msra.mxu0 %v577
    %709 = vmatprep.subr.mxu0 0.0
    %710 = vmatpush1.msra.mxu0 %v574
    %711 = vmatprep.subr.mxu0 0.0
    %712 = vmatpush1.msra.mxu0 %v571
    %713 = vmatprep.subr.mxu0 0.0
    %714 = vmatpush1.msra.mxu0 %v568
    %715 = vmatprep.subr.mxu0 0.0
    %716 = vmatpush1.msra.mxu0 %v565
    %717 = vmatprep.subr.mxu0 0.0
    %718 = vmatpush1.msra.mxu0 %v562
    %719 = vmatprep.subr.mxu0 0.0
    %720 = vmatpush1.msra.mxu0 %v559
    %721 = vmatprep.subr.mxu0 0.0
    %722 = vmatpush1.msra.mxu0 %v556
    %723 = vmatprep.subr.mxu0 0.0
    %724 = vmatpush1.msra.mxu0 %v553
    %725 = vmatprep.subr.mxu0 0.0
    %726 = vmatpush2.msra.mxu0 0.0
    %727 = vmatprep.subr.mxu0 0.0
    %728 = vmatpush2.msra.mxu0 0.0
    %729 = vmatprep.subr.mxu0 0.0
    %730 = vmatpush2.msra.mxu0 0.0
    %731 = vmatprep.subr.mxu0 0.0
    %732 = vmatpush2.msra.mxu0 0.0
    %733 = vmatprep.subr.mxu0 0.0
    %734 = vmatpush2.msra.mxu0 0.0
    %735 = vmatprep.subr.mxu0 0.0
    %736 = vmatpush2.msra.mxu0 0.0
    %737 = vmatprep.subr.mxu0 0.0
    %738 = vmatpush2.msra.mxu0 0.0
    %739 = vmatprep.subr.mxu0 0.0
    %740 = vmatpush2.msra.mxu0 0.0
    %741 = vmatprep.subr.mxu0 0.0
    %742 = vmatpush2.msra.mxu0 0.0
    %743 = vmatprep.subr.mxu0 0.0
    %744 = vmatpush2.msra.mxu0 0.0
    %745 = vmatprep.subr.mxu0 0.0
    %746 = vmatpush2.msra.mxu0 0.0
    %747 = vmatprep.subr.mxu0 0.0
    %748 = vmatpush2.msra.mxu0 0.0
    %749 = vmatprep.subr.mxu0 0.0
    %750 = vmatpush2.msra.mxu0 0.0
    %751 = vmatprep.subr.mxu0 0.0
    %752 = vmatpush2.msra.mxu0 0.0
    %753 = vmatprep.subr.mxu0 0.0
    %754 = vmatpush2.msra.mxu0 0.0
    %755 = vmatprep.subr.mxu0 0.0
    %756 = vmatpush2.msra.mxu0 0.0
    %757 = vmatprep.mubr.f32.mxu0 0.0
    %758 = vmatmul.mubr.f32.gmra.mxu0 0.0
    %v759 = vpop.f32.mrf.mxu0
    %v760 = vadd.f32 %v612, %v759
    %v761 = vpop.f32.mrf.mxu0
    %762 = vdwg.mxu0
    %v763 = vadd.f32 %v619, %v689
    %v764 = vxor.u32 %v763, 2147483648
    %v765 = vmul.f32 %v764, 1.442695
    %v766 = vpow.pop %v765
    %v767 = vadd.f32 %v766, 1.0
    %v768 = vrcp.pop %v767
    %v769 = vmul.f32 1.0, %v768
    %v770 = vadd.f32 %v620, %v691
    %v771 = vxor.u32 %v770, 2147483648
    %v772 = vmul.f32 %v771, 1.442695
    %v773 = vpow.pop %v772
    %v774 = vadd.f32 %v773, 1.0
    %v775 = vrcp.pop %v774
    %v776 = vmul.f32 1.0, %v775
    %v777 = vmul.f32 %v769, %v760
    %v778 = vadd.f32 %v621, %v777
    %v779 = vtanh.pop %v778
    %v780 = vsub.f32 1.0, %v776
    %v781 = vmul.f32 %v780, %v779
    %v782 = vmul.f32 %v776, 0.0
    %v783 = vadd.f32 %v781, %v782
    %s784 = smul.u32 1, 3
    %s785 = smul.addr %s784, 8
    %s786 = scalar_lea.vmem [#allocation2], %s785
    %v787 = vld [vmem:[%s786] sm:$0xff]
    %v788 = vld [vmem:[%s786 + $0x8] sm:$0xff]
    %v789 = vld [vmem:[%s786 + $0x10] sm:$0xff]
    %790 = vmatprep.subr.mxu0 %v597
    %791 = vmatpush1.msra.mxu0 %v596
    %792 = vmatprep.subr.mxu0 %v594
    %793 = vmatpush1.msra.mxu0 %v593
    %794 = vmatprep.subr.mxu0 %v591
    %795 = vmatpush1.msra.mxu0 %v590
    %796 = vmatprep.subr.mxu0 %v588
    %797 = vmatpush1.msra.mxu0 %v587
    %798 = vmatprep.subr.mxu0 %v585
    %799 = vmatpush1.msra.mxu0 %v584
    %800 = vmatprep.subr.mxu0 %v582
    %801 = vmatpush1.msra.mxu0 %v581
    %802 = vmatprep.subr.mxu0 %v579
    %803 = vmatpush1.msra.mxu0 %v578
    %804 = vmatprep.subr.mxu0 %v576
    %805 = vmatpush1.msra.mxu0 %v575
    %806 = vmatprep.subr.mxu0 %v573
    %807 = vmatpush1.msra.mxu0 %v572
    %808 = vmatprep.subr.mxu0 %v570
    %809 = vmatpush1.msra.mxu0 %v569
    %810 = vmatprep.subr.mxu0 %v567
    %811 = vmatpush1.msra.mxu0 %v566
    %812 = vmatprep.subr.mxu0 %v564
    %813 = vmatpush1.msra.mxu0 %v563
    %814 = vmatprep.subr.mxu0 %v561
    %815 = vmatpush1.msra.mxu0 %v560
    %816 = vmatprep.subr.mxu0 %v558
    %817 = vmatpush1.msra.mxu0 %v557
    %818 = vmatprep.subr.mxu0 %v555
    %819 = vmatpush1.msra.mxu0 %v554
    %820 = vmatprep.subr.mxu0 %v552
    %821 = vmatpush1.msra.mxu0 %v551
    %822 = vmatprep.subr.mxu0 0.0
    %823 = vmatpush2.msra.mxu0 0.0
    %824 = vmatprep.subr.mxu0 0.0
    %825 = vmatpush2.msra.mxu0 0.0
    %826 = vmatprep.subr.mxu0 0.0
    %827 = vmatpush2.msra.mxu0 0.0
    %828 = vmatprep.subr.mxu0 0.0
    %829 = vmatpush2.msra.mxu0 0.0
    %830 = vmatprep.subr.mxu0 0.0
    %831 = vmatpush2.msra.mxu0 0.0
    %832 = vmatprep.subr.mxu0 0.0
    %833 = vmatpush2.msra.mxu0 0.0
    %834 = vmatprep.subr.mxu0 0.0
    %835 = vmatpush2.msra.mxu0 0.0
    %836 = vmatprep.subr.mxu0 0.0
    %837 = vmatpush2.msra.mxu0 0.0
    %838 = vmatprep.subr.mxu0 0.0
    %839 = vmatpush2.msra.mxu0 0.0
    %840 = vmatprep.subr.mxu0 0.0
    %841 = vmatpush2.msra.mxu0 0.0
    %842 = vmatprep.subr.mxu0 0.0
    %843 = vmatpush2.msra.mxu0 0.0
    %844 = vmatprep.subr.mxu0 0.0
    %845 = vmatpush2.msra.mxu0 0.0
    %846 = vmatprep.subr.mxu0 0.0
    %847 = vmatpush2.msra.mxu0 0.0
    %848 = vmatprep.subr.mxu0 0.0
    %849 = vmatpush2.msra.mxu0 0.0
    %850 = vmatprep.subr.mxu0 0.0
    %851 = vmatpush2.msra.mxu0 0.0
    %852 = vmatprep.subr.mxu0 0.0
    %853 = vmatpush2.msra.mxu0 0.0
    %854 = vmatprep.mubr.f32.mxu0 0.0
    %855 = vmatmul.mubr.f32.gmra.mxu0 %v783
    %v856 = vpop.f32.mrf.mxu0
    %v857 = vadd.f32 %v604, %v856
    %v858 = vpop.f32.mrf.mxu0
    %v859 = vadd.f32 %v608, %v858
    %860 = vdwg.mxu0
    %861 = vmatprep.subr.mxu0 0.0
    %862 = vmatpush1.msra.mxu0 %v598
    %863 = vmatprep.subr.mxu0 0.0
    %864 = vmatpush1.msra.mxu0 %v595
    %865 = vmatprep.subr.mxu0 0.0
    %866 = vmatpush1.msra.mxu0 %v592
    %867 = vmatprep.subr.mxu0 0.0
    %868 = vmatpush1.msra.mxu0 %v589
    %869 = vmatprep.subr.mxu0 0.0
    %870 = vmatpush1.msra.mxu0 %v586
    %871 = vmatprep.subr.mxu0 0.0
    %872 = vmatpush1.msra.mxu0 %v583
    %873 = vmatprep.subr.mxu0 0.0
    %874 = vmatpush1.msra.mxu0 %v580
    %875 = vmatprep.subr.mxu0 0.0
    %876 = vmatpush1.msra.mxu0 %v577
    %877 = vmatprep.subr.mxu0 0.0
    %878 = vmatpush1.msra.mxu0 %v574
    %879 = vmatprep.subr.mxu0 0.0
    %880 = vmatpush1.msra.mxu0 %v571
    %881 = vmatprep.subr.mxu0 0.0
    %882 = vmatpush1.msra.mxu0 %v568
    %883 = vmatprep.subr.mxu0 0.0
    %884 = vmatpush1.msra.mxu0 %v565
    %885 = vmatprep.subr.mxu0 0.0
    %886 = vmatpush1.msra.mxu0 %v562
    %887 = vmatprep.subr.mxu0 0.0
    %888 = vmatpush1.msra.mxu0 %v559
    %889 = vmatprep.subr.mxu0 0.0
    %890 = vmatpush1.msra.mxu0 %v556
    %891 = vmatprep.subr.mxu0 0.0
    %892 = vmatpush1.msra.mxu0 %v553
    %893 = vmatprep.subr.mxu0 0.0
    %894 = vmatpush2.msra.mxu0 0.0
    %895 = vmatprep.subr.mxu0 0.0
    %896 = vmatpush2.msra.mxu0 0.0
    %897 = vmatprep.subr.mxu0 0.0
    %898 = vmatpush2.msra.mxu0 0.0
    %899 = vmatprep.subr.mxu0 0.0
    %900 = vmatpush2.msra.mxu0 0.0
    %901 = vmatprep.subr.mxu0 0.0
    %902 = vmatpush2.msra.mxu0 0.0
    %903 = vmatprep.subr.mxu0 0.0
    %904 = vmatpush2.msra.mxu0 0.0
    %905 = vmatprep.subr.mxu0 0.0
    %906 = vmatpush2.msra.mxu0 0.0
    %907 = vmatprep.subr.mxu0 0.0
    %908 = vmatpush2.msra.mxu0 0.0
    %909 = vmatprep.subr.mxu0 0.0
    %910 = vmatpush2.msra.mxu0 0.0
    %911 = vmatprep.subr.mxu0 0.0
    %912 = vmatpush2.msra.mxu0 0.0
    %913 = vmatprep.subr.mxu0 0.0
    %914 = vmatpush2.msra.mxu0 0.0
    %915 = vmatprep.subr.mxu0 0.0
    %916 = vmatpush2.msra.mxu0 0.0
    %917 = vmatprep.subr.mxu0 0.0
    %918 = vmatpush2.msra.mxu0 0.0
    %919 = vmatprep.subr.mxu0 0.0
    %920 = vmatpush2.msra.mxu0 0.0
    %921 = vmatprep.subr.mxu0 0.0
    %922 = vmatpush2.msra.mxu0 0.0
    %923 = vmatprep.subr.mxu0 0.0
    %924 = vmatpush2.msra.mxu0 0.0
    %925 = vmatprep.mubr.f32.mxu0 0.0
    %926 = vmatmul.mubr.f32.gmra.mxu0 %v783
    %v927 = vpop.f32.mrf.mxu0
    %v928 = vadd.f32 %v612, %v927
    %v929 = vpop.f32.mrf.mxu0
    %930 = vdwg.mxu0
    %v931 = vadd.f32 %v787, %v857
    %v932 = vxor.u32 %v931, 2147483648
    %v933 = vmul.f32 %v932, 1.442695
    %v934 = vpow.pop %v933
    %v935 = vadd.f32 %v934, 1.0
    %v936 = vrcp.pop %v935
    %v937 = vmul.f32 1.0, %v936
    %v938 = vadd.f32 %v788, %v859
    %v939 = vxor.u32 %v938, 2147483648
    %v940 = vmul.f32 %v939, 1.442695
    %v941 = vpow.pop %v940
    %v942 = vadd.f32 %v941, 1.0
    %v943 = vrcp.pop %v942
    %v944 = vmul.f32 1.0, %v943
    %v945 = vmul.f32 %v937, %v928
    %v946 = vadd.f32 %v789, %v945
    %v947 = vtanh.pop %v946
    %v948 = vsub.f32 1.0, %v944
    %v949 = vmul.f32 %v948, %v947
    %v950 = vmul.f32 %v944, %v783
    %v951 = vadd.f32 %v949, %v950
    %s952 = smul.u32 2, 3
    %s953 = smul.addr %s952, 8
    %s954 = scalar_lea.vmem [#allocation2], %s953
    %v955 = vld [vmem:[%s954] sm:$0xff]
    %v956 = vld [vmem:[%s954 + $0x8] sm:$0xff]
    %v957 = vld [vmem:[%s954 + $0x10] sm:$0xff]
    %958 = vmatprep.subr.mxu0 %v597
    %959 = vmatpush1.msra.mxu0 %v596
    %960 = vmatprep.subr.mxu0 %v594
    %961 = vmatpush1.msra.mxu0 %v593
    %962 = vmatprep.subr.mxu0 %v591
    %963 = vmatpush1.msra.mxu0 %v590
    %964 = vmatprep.subr.mxu0 %v588
    %965 = vmatpush1.msra.mxu0 %v587
    %966 = vmatprep.subr.mxu0 %v585
    %967 = vmatpush1.msra.mxu0 %v584
    %968 = vmatprep.subr.mxu0 %v582
    %969 = vmatpush1.msra.mxu0 %v581
    %970 = vmatprep.subr.mxu0 %v579
    %971 = vmatpush1.msra.mxu0 %v578
    %972 = vmatprep.subr.mxu0 %v576
    %973 = vmatpush1.msra.mxu0 %v575
    %974 = vmatprep.subr.mxu0 %v573
    %975 = vmatpush1.msra.mxu0 %v572
    %976 = vmatprep.subr.mxu0 %v570
    %977 = vmatpush1.msra.mxu0 %v569
    %978 = vmatprep.subr.mxu0 %v567
    %979 = vmatpush1.msra.mxu0 %v566
    %980 = vmatprep.subr.mxu0 %v564
    %981 = vmatpush1.msra.mxu0 %v563
    %982 = vmatprep.subr.mxu0 %v561
    %983 = vmatpush1.msra.mxu0 %v560
    %984 = vmatprep.subr.mxu0 %v558
    %985 = vmatpush1.msra.mxu0 %v557
    %986 = vmatprep.subr.mxu0 %v555
    %987 = vmatpush1.msra.mxu0 %v554
    %988 = vmatprep.subr.mxu0 %v552
    %989 = vmatpush1.msra.mxu0 %v551
    %990 = vmatprep.subr.mxu0 0.0
    %991 = vmatpush2.msra.mxu0 0.0
    %992 = vmatprep.subr.mxu0 0.0
    %993 = vmatpush2.msra.mxu0 0.0
    %994 = vmatprep.subr.mxu0 0.0
    %995 = vmatpush2.msra.mxu0 0.0
    %996 = vmatprep.subr.mxu0 0.0
    %997 = vmatpush2.msra.mxu0 0.0
    %998 = vmatprep.subr.mxu0 0.0
    %999 = vmatpush2.msra.mxu0 0.0
    %1000 = vmatprep.subr.mxu0 0.0
    %1001 = vmatpush2.msra.mxu0 0.0
    %1002 = vmatprep.subr.mxu0 0.0
    %1003 = vmatpush2.msra.mxu0 0.0
    %1004 = vmatprep.subr.mxu0 0.0
    %1005 = vmatpush2.msra.mxu0 0.0
    %1006 = vmatprep.subr.mxu0 0.0
    %1007 = vmatpush2.msra.mxu0 0.0
    %1008 = vmatprep.subr.mxu0 0.0
    %1009 = vmatpush2.msra.mxu0 0.0
    %1010 = vmatprep.subr.mxu0 0.0
    %1011 = vmatpush2.msra.mxu0 0.0
    %1012 = vmatprep.subr.mxu0 0.0
    %1013 = vmatpush2.msra.mxu0 0.0
    %1014 = vmatprep.subr.mxu0 0.0
    %1015 = vmatpush2.msra.mxu0 0.0
    %1016 = vmatprep.subr.mxu0 0.0
    %1017 = vmatpush2.msra.mxu0 0.0
    %1018 = vmatprep.subr.mxu0 0.0
    %1019 = vmatpush2.msra.mxu0 0.0
    %1020 = vmatprep.subr.mxu0 0.0
    %1021 = vmatpush2.msra.mxu0 0.0
    %1022 = vmatprep.mubr.f32.mxu0 0.0
    %1023 = vmatmul.mubr.f32.gmra.mxu0 %v951
    %v1024 = vpop.f32.mrf.mxu0
    %v1025 = vadd.f32 %v604, %v1024
    %v1026 = vpop.f32.mrf.mxu0
    %v1027 = vadd.f32 %v608, %v1026
    %1028 = vdwg.mxu0
    %1029 = vmatprep.subr.mxu0 0.0
    %1030 = vmatpush1.msra.mxu0 %v598
    %1031 = vmatprep.subr.mxu0 0.0
    %1032 = vmatpush1.msra.mxu0 %v595
    %1033 = vmatprep.subr.mxu0 0.0
    %1034 = vmatpush1.msra.mxu0 %v592
    %1035 = vmatprep.subr.mxu0 0.0
    %1036 = vmatpush1.msra.mxu0 %v589
    %1037 = vmatprep.subr.mxu0 0.0
    %1038 = vmatpush1.msra.mxu0 %v586
    %1039 = vmatprep.subr.mxu0 0.0
    %1040 = vmatpush1.msra.mxu0 %v583
    %1041 = vmatprep.subr.mxu0 0.0
    %1042 = vmatpush1.msra.mxu0 %v580
    %1043 = vmatprep.subr.mxu0 0.0
    %1044 = vmatpush1.msra.mxu0 %v577
    %1045 = vmatprep.subr.mxu0 0.0
    %1046 = vmatpush1.msra.mxu0 %v574
    %1047 = vmatprep.subr.mxu0 0.0
    %1048 = vmatpush1.msra.mxu0 %v571
    %1049 = vmatprep.subr.mxu0 0.0
    %1050 = vmatpush1.msra.mxu0 %v568
    %1051 = vmatprep.subr.mxu0 0.0
    %1052 = vmatpush1.msra.mxu0 %v565
    %1053 = vmatprep.subr.mxu0 0.0
    %1054 = vmatpush1.msra.mxu0 %v562
    %1055 = vmatprep.subr.mxu0 0.0
    %1056 = vmatpush1.msra.mxu0 %v559
    %1057 = vmatprep.subr.mxu0 0.0
    %1058 = vmatpush1.msra.mxu0 %v556
    %1059 = vmatprep.subr.mxu0 0.0
    %1060 = vmatpush1.msra.mxu0 %v553
    %1061 = vmatprep.subr.mxu0 0.0
    %1062 = vmatpush2.msra.mxu0 0.0
    %1063 = vmatprep.subr.mxu0 0.0
    %1064 = vmatpush2.msra.mxu0 0.0
    %1065 = vmatprep.subr.mxu0 0.0
    %1066 = vmatpush2.msra.mxu0 0.0
    %1067 = vmatprep.subr.mxu0 0.0
    %1068 = vmatpush2.msra.mxu0 0.0
    %1069 = vmatprep.subr.mxu0 0.0
    %1070 = vmatpush2.msra.mxu0 0.0
    %1071 = vmatprep.subr.mxu0 0.0
    %1072 = vmatpush2.msra.mxu0 0.0
    %1073 = vmatprep.subr.mxu0 0.0
    %1074 = vmatpush2.msra.mxu0 0.0
    %1075 = vmatprep.subr.mxu0 0.0
    %1076 = vmatpush2.msra.mxu0 0.0
    %1077 = vmatprep.subr.mxu0 0.0
    %1078 = vmatpush2.msra.mxu0 0.0
    %1079 = vmatprep.subr.mxu0 0.0
    %1080 = vmatpush2.msra.mxu0 0.0
    %1081 = vmatprep.subr.mxu0 0.0
    %1082 = vmatpush2.msra.mxu0 0.0
    %1083 = vmatprep.subr.mxu0 0.0
    %1084 = vmatpush2.msra.mxu0 0.0
    %1085 = vmatprep.subr.mxu0 0.0
    %1086 = vmatpush2.msra.mxu0 0.0
    %1087 = vmatprep.subr.mxu0 0.0
    %1088 = vmatpush2.msra.mxu0 0.0
    %1089 = vmatprep.subr.mxu0 0.0
    %1090 = vmatpush2.msra.mxu0 0.0
    %1091 = vmatprep.subr.mxu0 0.0
    %1092 = vmatpush2.msra.mxu0 0.0
    %1093 = vmatprep.mubr.f32.mxu0 0.0
    %1094 = vmatmul.mubr.f32.gmra.mxu0 %v951
    %v1095 = vpop.f32.mrf.mxu0
    %v1096 = vadd.f32 %v612, %v1095
    %v1097 = vpop.f32.mrf.mxu0
    %1098 = vdwg.mxu0
    %v1099 = vadd.f32 %v955, %v1025
    %v1100 = vxor.u32 %v1099, 2147483648
    %v1101 = vmul.f32 %v1100, 1.442695
    %v1102 = vpow.pop %v1101
    %v1103 = vadd.f32 %v1102, 1.0
    %v1104 = vrcp.pop %v1103
    %v1105 = vmul.f32 1.0, %v1104
    %v1106 = vadd.f32 %v956, %v1027
    %v1107 = vxor.u32 %v1106, 2147483648
    %v1108 = vmul.f32 %v1107, 1.442695
    %v1109 = vpow.pop %v1108
    %v1110 = vadd.f32 %v1109, 1.0
    %v1111 = vrcp.pop %v1110
    %v1112 = vmul.f32 1.0, %v1111
    %v1113 = vmul.f32 %v1105, %v1096
    %v1114 = vadd.f32 %v957, %v1113
    %v1115 = vtanh.pop %v1114
    %v1116 = vsub.f32 1.0, %v1112
    %v1117 = vmul.f32 %v1116, %v1115
    %v1118 = vmul.f32 %v1112, %v951
    %v1119 = vadd.f32 %v1117, %v1118
    %s1120 = smul.u32 3, 3
    %s1121 = smul.addr %s1120, 8
    %s1122 = scalar_lea.vmem [#allocation2], %s1121
    %v1123 = vld [vmem:[%s1122] sm:$0xff]
    %v1124 = vld [vmem:[%s1122 + $0x8] sm:$0xff]
    %v1125 = vld [vmem:[%s1122 + $0x10] sm:$0xff]
    %1126 = vmatprep.subr.mxu0 %v597
    %1127 = vmatpush1.msra.mxu0 %v596
    %1128 = vmatprep.subr.mxu0 %v594
    %1129 = vmatpush1.msra.mxu0 %v593
    %1130 = vmatprep.subr.mxu0 %v591
    %1131 = vmatpush1.msra.mxu0 %v590
    %1132 = vmatprep.subr.mxu0 %v588
    %1133 = vmatpush1.msra.mxu0 %v587
    %1134 = vmatprep.subr.mxu0 %v585
    %1135 = vmatpush1.msra.mxu0 %v584
    %1136 = vmatprep.subr.mxu0 %v582
    %1137 = vmatpush1.msra.mxu0 %v581
    %1138 = vmatprep.subr.mxu0 %v579
    %1139 = vmatpush1.msra.mxu0 %v578
    %1140 = vmatprep.subr.mxu0 %v576
    %1141 = vmatpush1.msra.mxu0 %v575
    %1142 = vmatprep.subr.mxu0 %v573
    %1143 = vmatpush1.msra.mxu0 %v572
    %1144 = vmatprep.subr.mxu0 %v570
    %1145 = vmatpush1.msra.mxu0 %v569
    %1146 = vmatprep.subr.mxu0 %v567
    %1147 = vmatpush1.msra.mxu0 %v566
    %1148 = vmatprep.subr.mxu0 %v564
    %1149 = vmatpush1.msra.mxu0 %v563
    %1150 = vmatprep.subr.mxu0 %v561
    %1151 = vmatpush1.msra.mxu0 %v560
    %1152 = vmatprep.subr.mxu0 %v558
    %1153 = vmatpush1.msra.mxu0 %v557
    %1154 = vmatprep.subr.mxu0 %v555
    %1155 = vmatpush1.msra.mxu0 %v554
    %1156 = vmatprep.subr.mxu0 %v552
    %1157 = vmatpush1.msra.mxu0 %v551
    %1158 = vmatprep.subr.mxu0 0.0
    %1159 = vmatpush2.msra.mxu0 0.0
    %1160 = vmatprep.subr.mxu0 0.0
    %1161 = vmatpush2.msra.mxu0 0.0
    %1162 = vmatprep.subr.mxu0 0.0
    %1163 = vmatpush2.msra.mxu0 0.0
    %1164 = vmatprep.subr.mxu0 0.0
    %1165 = vmatpush2.msra.mxu0 0.0
    %1166 = vmatprep.subr.mxu0 0.0
    %1167 = vmatpush2.msra.mxu0 0.0
    %1168 = vmatprep.subr.mxu0 0.0
    %1169 = vmatpush2.msra.mxu0 0.0
    %1170 = vmatprep.subr.mxu0 0.0
    %1171 = vmatpush2.msra.mxu0 0.0
    %1172 = vmatprep.subr.mxu0 0.0
    %1173 = vmatpush2.msra.mxu0 0.0
    %1174 = vmatprep.subr.mxu0 0.0
    %1175 = vmatpush2.msra.mxu0 0.0
    %1176 = vmatprep.subr.mxu0 0.0
    %1177 = vmatpush2.msra.mxu0 0.0
    %1178 = vmatprep.subr.mxu0 0.0
    %1179 = vmatpush2.msra.mxu0 0.0
    %1180 = vmatprep.subr.mxu0 0.0
    %1181 = vmatpush2.msra.mxu0 0.0
    %1182 = vmatprep.subr.mxu0 0.0
    %1183 = vmatpush2.msra.mxu0 0.0
    %1184 = vmatprep.subr.mxu0 0.0
    %1185 = vmatpush2.msra.mxu0 0.0
    %1186 = vmatprep.subr.mxu0 0.0
    %1187 = vmatpush2.msra.mxu0 0.0
    %1188 = vmatprep.subr.mxu0 0.0
    %1189 = vmatpush2.msra.mxu0 0.0
    %1190 = vmatprep.mubr.f32.mxu0 0.0
    %1191 = vmatmul.mubr.f32.gmra.mxu0 %v1119
    %v1192 = vpop.f32.mrf.mxu0
    %v1193 = vadd.f32 %v604, %v1192
    %v1194 = vpop.f32.mrf.mxu0
    %v1195 = vadd.f32 %v608, %v1194
    %1196 = vdwg.mxu0
    %1197 = vmatprep.subr.mxu0 0.0
    %1198 = vmatpush1.msra.mxu0 %v598
    %1199 = vmatprep.subr.mxu0 0.0
    %1200 = vmatpush1.msra.mxu0 %v595
    %1201 = vmatprep.subr.mxu0 0.0
    %1202 = vmatpush1.msra.mxu0 %v592
    %1203 = vmatprep.subr.mxu0 0.0
    %1204 = vmatpush1.msra.mxu0 %v589
    %1205 = vmatprep.subr.mxu0 0.0
    %1206 = vmatpush1.msra.mxu0 %v586
    %1207 = vmatprep.subr.mxu0 0.0
    %1208 = vmatpush1.msra.mxu0 %v583
    %1209 = vmatprep.subr.mxu0 0.0
    %1210 = vmatpush1.msra.mxu0 %v580
    %1211 = vmatprep.subr.mxu0 0.0
    %1212 = vmatpush1.msra.mxu0 %v577
    %1213 = vmatprep.subr.mxu0 0.0
    %1214 = vmatpush1.msra.mxu0 %v574
    %1215 = vmatprep.subr.mxu0 0.0
    %1216 = vmatpush1.msra.mxu0 %v571
    %1217 = vmatprep.subr.mxu0 0.0
    %1218 = vmatpush1.msra.mxu0 %v568
    %1219 = vmatprep.subr.mxu0 0.0
    %1220 = vmatpush1.msra.mxu0 %v565
    %1221 = vmatprep.subr.mxu0 0.0
    %1222 = vmatpush1.msra.mxu0 %v562
    %1223 = vmatprep.subr.mxu0 0.0
    %1224 = vmatpush1.msra.mxu0 %v559
    %1225 = vmatprep.subr.mxu0 0.0
    %1226 = vmatpush1.msra.mxu0 %v556
    %1227 = vmatprep.subr.mxu0 0.0
    %1228 = vmatpush1.msra.mxu0 %v553
    %1229 = vmatprep.subr.mxu0 0.0
    %1230 = vmatpush2.msra.mxu0 0.0
    %1231 = vmatprep.subr.mxu0 0.0
    %1232 = vmatpush2.msra.mxu0 0.0
    %1233 = vmatprep.subr.mxu0 0.0
    %1234 = vmatpush2.msra.mxu0 0.0
    %1235 = vmatprep.subr.mxu0 0.0
    %1236 = vmatpush2.msra.mxu0 0.0
    %1237 = vmatprep.subr.mxu0 0.0
    %1238 = vmatpush2.msra.mxu0 0.0
    %1239 = vmatprep.subr.mxu0 0.0
    %1240 = vmatpush2.msra.mxu0 0.0
    %1241 = vmatprep.subr.mxu0 0.0
    %1242 = vmatpush2.msra.mxu0 0.0
    %1243 = vmatprep.subr.mxu0 0.0
    %1244 = vmatpush2.msra.mxu0 0.0
    %1245 = vmatprep.subr.mxu0 0.0
    %1246 = vmatpush2.msra.mxu0 0.0
    %1247 = vmatprep.subr.mxu0 0.0
    %1248 = vmatpush2.msra.mxu0 0.0
    %1249 = vmatprep.subr.mxu0 0.0
    %1250 = vmatpush2.msra.mxu0 0.0
    %1251 = vmatprep.subr.mxu0 0.0
    %1252 = vmatpush2.msra.mxu0 0.0
    %1253 = vmatprep.subr.mxu0 0.0
    %1254 = vmatpush2.msra.mxu0 0.0
    %1255 = vmatprep.subr.mxu0 0.0
    %1256 = vmatpush2.msra.mxu0 0.0
    %1257 = vmatprep.subr.mxu0 0.0
    %1258 = vmatpush2.msra.mxu0 0.0
    %1259 = vmatprep.subr.mxu0 0.0
    %1260 = vmatpush2.msra.mxu0 0.0
    %1261 = vmatprep.mubr.f32.mxu0 0.0
    %1262 = vmatmul.mubr.f32.gmra.mxu0 %v1119
    %v1263 = vpop.f32.mrf.mxu0
    %v1264 = vadd.f32 %v612, %v1263
    %v1265 = vpop.f32.mrf.mxu0
    %1266 = vdwg.mxu0
    %v1267 = vadd.f32 %v1123, %v1193
    %v1268 = vxor.u32 %v1267, 2147483648
    %v1269 = vmul.f32 %v1268, 1.442695
    %v1270 = vpow.pop %v1269
    %v1271 = vadd.f32 %v1270, 1.0
    %v1272 = vrcp.pop %v1271
    %v1273 = vmul.f32 1.0, %v1272
    %v1274 = vadd.f32 %v1124, %v1195
    %v1275 = vxor.u32 %v1274, 2147483648
    %v1276 = vmul.f32 %v1275, 1.442695
    %v1277 = vpow.pop %v1276
    %v1278 = vadd.f32 %v1277, 1.0
    %v1279 = vrcp.pop %v1278
    %v1280 = vmul.f32 1.0, %v1279
    %v1281 = vmul.f32 %v1273, %v1264
    %v1282 = vadd.f32 %v1125, %v1281
    %v1283 = vtanh.pop %v1282
    %v1284 = vsub.f32 1.0, %v1280
    %v1285 = vmul.f32 %v1284, %v1283
    %v1286 = vmul.f32 %v1280, %v1119
    %v1287 = vadd.f32 %v1285, %v1286
    %s1288 = smul.u32 4, 3
    %s1289 = smul.addr %s1288, 8
    %s1290 = scalar_lea.vmem [#allocation2], %s1289
    %v1291 = vld [vmem:[%s1290] sm:$0xff]
    %v1292 = vld [vmem:[%s1290 + $0x8] sm:$0xff]
    %v1293 = vld [vmem:[%s1290 + $0x10] sm:$0xff]
    %1294 = vmatprep.subr.mxu0 %v597
    %1295 = vmatpush1.msra.mxu0 %v596
    %1296 = vmatprep.subr.mxu0 %v594
    %1297 = vmatpush1.msra.mxu0 %v593
    %1298 = vmatprep.subr.mxu0 %v591
    %1299 = vmatpush1.msra.mxu0 %v590
    %1300 = vmatprep.subr.mxu0 %v588
    %1301 = vmatpush1.msra.mxu0 %v587
    %1302 = vmatprep.subr.mxu0 %v585
    %1303 = vmatpush1.msra.mxu0 %v584
    %1304 = vmatprep.subr.mxu0 %v582
    %1305 = vmatpush1.msra.mxu0 %v581
    %1306 = vmatprep.subr.mxu0 %v579
    %1307 = vmatpush1.msra.mxu0 %v578
    %1308 = vmatprep.subr.mxu0 %v576
    %1309 = vmatpush1.msra.mxu0 %v575
    %1310 = vmatprep.subr.mxu0 %v573
    %1311 = vmatpush1.msra.mxu0 %v572
    %1312 = vmatprep.subr.mxu0 %v570
    %1313 = vmatpush1.msra.mxu0 %v569
    %1314 = vmatprep.subr.mxu0 %v567
    %1315 = vmatpush1.msra.mxu0 %v566
    %1316 = vmatprep.subr.mxu0 %v564
    %1317 = vmatpush1.msra.mxu0 %v563
    %1318 = vmatprep.subr.mxu0 %v561
    %1319 = vmatpush1.msra.mxu0 %v560
    %1320 = vmatprep.subr.mxu0 %v558
    %1321 = vmatpush1.msra.mxu0 %v557
    %1322 = vmatprep.subr.mxu0 %v555
    %1323 = vmatpush1.msra.mxu0 %v554
    %1324 = vmatprep.subr.mxu0 %v552
    %1325 = vmatpush1.msra.mxu0 %v551
    %1326 = vmatprep.subr.mxu0 0.0
    %1327 = vmatpush2.msra.mxu0 0.0
    %1328 = vmatprep.subr.mxu0 0.0
    %1329 = vmatpush2.msra.mxu0 0.0
    %1330 = vmatprep.subr.mxu0 0.0
    %1331 = vmatpush2.msra.mxu0 0.0
    %1332 = vmatprep.subr.mxu0 0.0
    %1333 = vmatpush2.msra.mxu0 0.0
    %1334 = vmatprep.subr.mxu0 0.0
    %1335 = vmatpush2.msra.mxu0 0.0
    %1336 = vmatprep.subr.mxu0 0.0
    %1337 = vmatpush2.msra.mxu0 0.0
    %1338 = vmatprep.subr.mxu0 0.0
    %1339 = vmatpush2.msra.mxu0 0.0
    %1340 = vmatprep.subr.mxu0 0.0
    %1341 = vmatpush2.msra.mxu0 0.0
    %1342 = vmatprep.subr.mxu0 0.0
    %1343 = vmatpush2.msra.mxu0 0.0
    %1344 = vmatprep.subr.mxu0 0.0
    %1345 = vmatpush2.msra.mxu0 0.0
    %1346 = vmatprep.subr.mxu0 0.0
    %1347 = vmatpush2.msra.mxu0 0.0
    %1348 = vmatprep.subr.mxu0 0.0
    %1349 = vmatpush2.msra.mxu0 0.0
    %1350 = vmatprep.subr.mxu0 0.0
    %1351 = vmatpush2.msra.mxu0 0.0
    %1352 = vmatprep.subr.mxu0 0.0
    %1353 = vmatpush2.msra.mxu0 0.0
    %1354 = vmatprep.subr.mxu0 0.0
    %1355 = vmatpush2.msra.mxu0 0.0
    %1356 = vmatprep.subr.mxu0 0.0
    %1357 = vmatpush2.msra.mxu0 0.0
    %1358 = vmatprep.mubr.f32.mxu0 0.0
    %1359 = vmatmul.mubr.f32.gmra.mxu0 %v1287
    %v1360 = vpop.f32.mrf.mxu0
    %v1361 = vadd.f32 %v604, %v1360
    %v1362 = vpop.f32.mrf.mxu0
    %v1363 = vadd.f32 %v608, %v1362
    %1364 = vdwg.mxu0
    %1365 = vmatprep.subr.mxu0 0.0
    %1366 = vmatpush1.msra.mxu0 %v598
    %1367 = vmatprep.subr.mxu0 0.0
    %1368 = vmatpush1.msra.mxu0 %v595
    %1369 = vmatprep.subr.mxu0 0.0
    %1370 = vmatpush1.msra.mxu0 %v592
    %1371 = vmatprep.subr.mxu0 0.0
    %1372 = vmatpush1.msra.mxu0 %v589
    %1373 = vmatprep.subr.mxu0 0.0
    %1374 = vmatpush1.msra.mxu0 %v586
    %1375 = vmatprep.subr.mxu0 0.0
    %1376 = vmatpush1.msra.mxu0 %v583
    %1377 = vmatprep.subr.mxu0 0.0
    %1378 = vmatpush1.msra.mxu0 %v580
    %1379 = vmatprep.subr.mxu0 0.0
    %1380 = vmatpush1.msra.mxu0 %v577
    %1381 = vmatprep.subr.mxu0 0.0
    %1382 = vmatpush1.msra.mxu0 %v574
    %1383 = vmatprep.subr.mxu0 0.0
    %1384 = vmatpush1.msra.mxu0 %v571
    %1385 = vmatprep.subr.mxu0 0.0
    %1386 = vmatpush1.msra.mxu0 %v568
    %1387 = vmatprep.subr.mxu0 0.0
    %1388 = vmatpush1.msra.mxu0 %v565
    %1389 = vmatprep.subr.mxu0 0.0
    %1390 = vmatpush1.msra.mxu0 %v562
    %1391 = vmatprep.subr.mxu0 0.0
    %1392 = vmatpush1.msra.mxu0 %v559
    %1393 = vmatprep.subr.mxu0 0.0
    %1394 = vmatpush1.msra.mxu0 %v556
    %1395 = vmatprep.subr.mxu0 0.0
    %1396 = vmatpush1.msra.mxu0 %v553
    %1397 = vmatprep.subr.mxu0 0.0
    %1398 = vmatpush2.msra.mxu0 0.0
    %1399 = vmatprep.subr.mxu0 0.0
    %1400 = vmatpush2.msra.mxu0 0.0
    %1401 = vmatprep.subr.mxu0 0.0
    %1402 = vmatpush2.msra.mxu0 0.0
    %1403 = vmatprep.subr.mxu0 0.0
    %1404 = vmatpush2.msra.mxu0 0.0
    %1405 = vmatprep.subr.mxu0 0.0
    %1406 = vmatpush2.msra.mxu0 0.0
    %1407 = vmatprep.subr.mxu0 0.0
    %1408 = vmatpush2.msra.mxu0 0.0
    %1409 = vmatprep.subr.mxu0 0.0
    %1410 = vmatpush2.msra.mxu0 0.0
    %1411 = vmatprep.subr.mxu0 0.0
    %1412 = vmatpush2.msra.mxu0 0.0
    %1413 = vmatprep.subr.mxu0 0.0
    %1414 = vmatpush2.msra.mxu0 0.0
    %1415 = vmatprep.subr.mxu0 0.0
    %1416 = vmatpush2.msra.mxu0 0.0
    %1417 = vmatprep.subr.mxu0 0.0
    %1418 = vmatpush2.msra.mxu0 0.0
    %1419 = vmatprep.subr.mxu0 0.0
    %1420 = vmatpush2.msra.mxu0 0.0
    %1421 = vmatprep.subr.mxu0 0.0
    %1422 = vmatpush2.msra.mxu0 0.0
    %1423 = vmatprep.subr.mxu0 0.0
    %1424 = vmatpush2.msra.mxu0 0.0
    %1425 = vmatprep.subr.mxu0 0.0
    %1426 = vmatpush2.msra.mxu0 0.0
    %1427 = vmatprep.subr.mxu0 0.0
    %1428 = vmatpush2.msra.mxu0 0.0
    %1429 = vmatprep.mubr.f32.mxu0 0.0
    %1430 = vmatmul.mubr.f32.gmra.mxu0 %v1287
    %v1431 = vpop.f32.mrf.mxu0
    %v1432 = vadd.f32 %v612, %v1431
    %v1433 = vpop.f32.mrf.mxu0
    %1434 = vdwg.mxu0
    %v1435 = vadd.f32 %v1291, %v1361
    %v1436 = vxor.u32 %v1435, 2147483648
    %v1437 = vmul.f32 %v1436, 1.442695
    %v1438 = vpow.pop %v1437
    %v1439 = vadd.f32 %v1438, 1.0
    %v1440 = vrcp.pop %v1439
    %v1441 = vmul.f32 1.0, %v1440
    %v1442 = vadd.f32 %v1292, %v1363
    %v1443 = vxor.u32 %v1442, 2147483648
    %v1444 = vmul.f32 %v1443, 1.442695
    %v1445 = vpow.pop %v1444
    %v1446 = vadd.f32 %v1445, 1.0
    %v1447 = vrcp.pop %v1446
    %v1448 = vmul.f32 1.0, %v1447
    %v1449 = vmul.f32 %v1441, %v1432
    %v1450 = vadd.f32 %v1293, %v1449
    %v1451 = vtanh.pop %v1450
    %v1452 = vsub.f32 1.0, %v1448
    %v1453 = vmul.f32 %v1452, %v1451
    %v1454 = vmul.f32 %v1448, %v1287
    %v1455 = vadd.f32 %v1453, %v1454
    %s1456 = smul.u32 5, 3
    %s1457 = smul.addr %s1456, 8
    %s1458 = scalar_lea.vmem [#allocation2], %s1457
    %v1459 = vld [vmem:[%s1458] sm:$0xff]
    %v1460 = vld [vmem:[%s1458 + $0x8] sm:$0xff]
    %v1461 = vld [vmem:[%s1458 + $0x10] sm:$0xff]
    %1462 = vmatprep.subr.mxu0 %v597
    %1463 = vmatpush1.msra.mxu0 %v596
    %1464 = vmatprep.subr.mxu0 %v594
    %1465 = vmatpush1.msra.mxu0 %v593
    %1466 = vmatprep.subr.mxu0 %v591
    %1467 = vmatpush1.msra.mxu0 %v590
    %1468 = vmatprep.subr.mxu0 %v588
    %1469 = vmatpush1.msra.mxu0 %v587
    %1470 = vmatprep.subr.mxu0 %v585
    %1471 = vmatpush1.msra.mxu0 %v584
    %1472 = vmatprep.subr.mxu0 %v582
    %1473 = vmatpush1.msra.mxu0 %v581
    %1474 = vmatprep.subr.mxu0 %v579
    %1475 = vmatpush1.msra.mxu0 %v578
    %1476 = vmatprep.subr.mxu0 %v576
    %1477 = vmatpush1.msra.mxu0 %v575
    %1478 = vmatprep.subr.mxu0 %v573
    %1479 = vmatpush1.msra.mxu0 %v572
    %1480 = vmatprep.subr.mxu0 %v570
    %1481 = vmatpush1.msra.mxu0 %v569
    %1482 = vmatprep.subr.mxu0 %v567
    %1483 = vmatpush1.msra.mxu0 %v566
    %1484 = vmatprep.subr.mxu0 %v564
    %1485 = vmatpush1.msra.mxu0 %v563
    %1486 = vmatprep.subr.mxu0 %v561
    %1487 = vmatpush1.msra.mxu0 %v560
    %1488 = vmatprep.subr.mxu0 %v558
    %1489 = vmatpush1.msra.mxu0 %v557
    %1490 = vmatprep.subr.mxu0 %v555
    %1491 = vmatpush1.msra.mxu0 %v554
    %1492 = vmatprep.subr.mxu0 %v552
    %1493 = vmatpush1.msra.mxu0 %v551
    %1494 = vmatprep.subr.mxu0 0.0
    %1495 = vmatpush2.msra.mxu0 0.0
    %1496 = vmatprep.subr.mxu0 0.0
    %1497 = vmatpush2.msra.mxu0 0.0
    %1498 = vmatprep.subr.mxu0 0.0
    %1499 = vmatpush2.msra.mxu0 0.0
    %1500 = vmatprep.subr.mxu0 0.0
    %1501 = vmatpush2.msra.mxu0 0.0
    %1502 = vmatprep.subr.mxu0 0.0
    %1503 = vmatpush2.msra.mxu0 0.0
    %1504 = vmatprep.subr.mxu0 0.0
    %1505 = vmatpush2.msra.mxu0 0.0
    %1506 = vmatprep.subr.mxu0 0.0
    %1507 = vmatpush2.msra.mxu0 0.0
    %1508 = vmatprep.subr.mxu0 0.0
    %1509 = vmatpush2.msra.mxu0 0.0
    %1510 = vmatprep.subr.mxu0 0.0
    %1511 = vmatpush2.msra.mxu0 0.0
    %1512 = vmatprep.subr.mxu0 0.0
    %1513 = vmatpush2.msra.mxu0 0.0
    %1514 = vmatprep.subr.mxu0 0.0
    %1515 = vmatpush2.msra.mxu0 0.0
    %1516 = vmatprep.subr.mxu0 0.0
    %1517 = vmatpush2.msra.mxu0 0.0
    %1518 = vmatprep.subr.mxu0 0.0
    %1519 = vmatpush2.msra.mxu0 0.0
    %1520 = vmatprep.subr.mxu0 0.0
    %1521 = vmatpush2.msra.mxu0 0.0
    %1522 = vmatprep.subr.mxu0 0.0
    %1523 = vmatpush2.msra.mxu0 0.0
    %1524 = vmatprep.subr.mxu0 0.0
    %1525 = vmatpush2.msra.mxu0 0.0
    %1526 = vmatprep.mubr.f32.mxu0 0.0
    %1527 = vmatmul.mubr.f32.gmra.mxu0 %v1455
    %v1528 = vpop.f32.mrf.mxu0
    %v1529 = vadd.f32 %v604, %v1528
    %v1530 = vpop.f32.mrf.mxu0
    %v1531 = vadd.f32 %v608, %v1530
    %1532 = vdwg.mxu0
    %1533 = vmatprep.subr.mxu0 0.0
    %1534 = vmatpush1.msra.mxu0 %v598
    %1535 = vmatprep.subr.mxu0 0.0
    %1536 = vmatpush1.msra.mxu0 %v595
    %1537 = vmatprep.subr.mxu0 0.0
    %1538 = vmatpush1.msra.mxu0 %v592
    %1539 = vmatprep.subr.mxu0 0.0
    %1540 = vmatpush1.msra.mxu0 %v589
    %1541 = vmatprep.subr.mxu0 0.0
    %1542 = vmatpush1.msra.mxu0 %v586
    %1543 = vmatprep.subr.mxu0 0.0
    %1544 = vmatpush1.msra.mxu0 %v583
    %1545 = vmatprep.subr.mxu0 0.0
    %1546 = vmatpush1.msra.mxu0 %v580
    %1547 = vmatprep.subr.mxu0 0.0
    %1548 = vmatpush1.msra.mxu0 %v577
    %1549 = vmatprep.subr.mxu0 0.0
    %1550 = vmatpush1.msra.mxu0 %v574
    %1551 = vmatprep.subr.mxu0 0.0
    %1552 = vmatpush1.msra.mxu0 %v571
    %1553 = vmatprep.subr.mxu0 0.0
    %1554 = vmatpush1.msra.mxu0 %v568
    %1555 = vmatprep.subr.mxu0 0.0
    %1556 = vmatpush1.msra.mxu0 %v565
    %1557 = vmatprep.subr.mxu0 0.0
    %1558 = vmatpush1.msra.mxu0 %v562
    %1559 = vmatprep.subr.mxu0 0.0
    %1560 = vmatpush1.msra.mxu0 %v559
    %1561 = vmatprep.subr.mxu0 0.0
    %1562 = vmatpush1.msra.mxu0 %v556
    %1563 = vmatprep.subr.mxu0 0.0
    %1564 = vmatpush1.msra.mxu0 %v553
    %1565 = vmatprep.subr.mxu0 0.0
    %1566 = vmatpush2.msra.mxu0 0.0
    %1567 = vmatprep.subr.mxu0 0.0
    %1568 = vmatpush2.msra.mxu0 0.0
    %1569 = vmatprep.subr.mxu0 0.0
    %1570 = vmatpush2.msra.mxu0 0.0
    %1571 = vmatprep.subr.mxu0 0.0
    %1572 = vmatpush2.msra.mxu0 0.0
    %1573 = vmatprep.subr.mxu0 0.0
    %1574 = vmatpush2.msra.mxu0 0.0
    %1575 = vmatprep.subr.mxu0 0.0
    %1576 = vmatpush2.msra.mxu0 0.0
    %1577 = vmatprep.subr.mxu0 0.0
    %1578 = vmatpush2.msra.mxu0 0.0
    %1579 = vmatprep.subr.mxu0 0.0
    %1580 = vmatpush2.msra.mxu0 0.0
    %1581 = vmatprep.subr.mxu0 0.0
    %1582 = vmatpush2.msra.mxu0 0.0
    %1583 = vmatprep.subr.mxu0 0.0
    %1584 = vmatpush2.msra.mxu0 0.0
    %1585 = vmatprep.subr.mxu0 0.0
    %1586 = vmatpush2.msra.mxu0 0.0
    %1587 = vmatprep.subr.mxu0 0.0
    %1588 = vmatpush2.msra.mxu0 0.0
    %1589 = vmatprep.subr.mxu0 0.0
    %1590 = vmatpush2.msra.mxu0 0.0
    %1591 = vmatprep.subr.mxu0 0.0
    %1592 = vmatpush2.msra.mxu0 0.0
    %1593 = vmatprep.subr.mxu0 0.0
    %1594 = vmatpush2.msra.mxu0 0.0
    %1595 = vmatprep.subr.mxu0 0.0
    %1596 = vmatpush2.msra.mxu0 0.0
    %1597 = vmatprep.mubr.f32.mxu0 0.0
    %1598 = vmatmul.mubr.f32.gmra.mxu0 %v1455
    %v1599 = vpop.f32.mrf.mxu0
    %v1600 = vadd.f32 %v612, %v1599
    %v1601 = vpop.f32.mrf.mxu0
    %1602 = vdwg.mxu0
    %v1603 = vadd.f32 %v1459, %v1529
    %v1604 = vxor.u32 %v1603, 2147483648
    %v1605 = vmul.f32 %v1604, 1.442695
    %v1606 = vpow.pop %v1605
    %v1607 = vadd.f32 %v1606, 1.0
    %v1608 = vrcp.pop %v1607
    %v1609 = vmul.f32 1.0, %v1608
    %v1610 = vadd.f32 %v1460, %v1531
    %v1611 = vxor.u32 %v1610, 2147483648
    %v1612 = vmul.f32 %v1611, 1.442695
    %v1613 = vpow.pop %v1612
    %v1614 = vadd.f32 %v1613, 1.0
    %v1615 = vrcp.pop %v1614
    %v1616 = vmul.f32 1.0, %v1615
    %v1617 = vmul.f32 %v1609, %v1600
    %v1618 = vadd.f32 %v1461, %v1617
    %v1619 = vtanh.pop %v1618
    %v1620 = vsub.f32 1.0, %v1616
    %v1621 = vmul.f32 %v1620, %v1619
    %v1622 = vmul.f32 %v1616, %v1455
    %v1623 = vadd.f32 %v1621, %v1622
    %s1624 = smul.u32 6, 3
    %s1625 = smul.addr %s1624, 8
    %s1626 = scalar_lea.vmem [#allocation2], %s1625
    %v1627 = vld [vmem:[%s1626] sm:$0xff]
    %v1628 = vld [vmem:[%s1626 + $0x8] sm:$0xff]
    %v1629 = vld [vmem:[%s1626 + $0x10] sm:$0xff]
    %1630 = vmatprep.subr.mxu0 %v597
    %1631 = vmatpush1.msra.mxu0 %v596
    %1632 = vmatprep.subr.mxu0 %v594
    %1633 = vmatpush1.msra.mxu0 %v593
    %1634 = vmatprep.subr.mxu0 %v591
    %1635 = vmatpush1.msra.mxu0 %v590
    %1636 = vmatprep.subr.mxu0 %v588
    %1637 = vmatpush1.msra.mxu0 %v587
    %1638 = vmatprep.subr.mxu0 %v585
    %1639 = vmatpush1.msra.mxu0 %v584
    %1640 = vmatprep.subr.mxu0 %v582
    %1641 = vmatpush1.msra.mxu0 %v581
    %1642 = vmatprep.subr.mxu0 %v579
    %1643 = vmatpush1.msra.mxu0 %v578
    %1644 = vmatprep.subr.mxu0 %v576
    %1645 = vmatpush1.msra.mxu0 %v575
    %1646 = vmatprep.subr.mxu0 %v573
    %1647 = vmatpush1.msra.mxu0 %v572
    %1648 = vmatprep.subr.mxu0 %v570
    %1649 = vmatpush1.msra.mxu0 %v569
    %1650 = vmatprep.subr.mxu0 %v567
    %1651 = vmatpush1.msra.mxu0 %v566
    %1652 = vmatprep.subr.mxu0 %v564
    %1653 = vmatpush1.msra.mxu0 %v563
    %1654 = vmatprep.subr.mxu0 %v561
    %1655 = vmatpush1.msra.mxu0 %v560
    %1656 = vmatprep.subr.mxu0 %v558
    %1657 = vmatpush1.msra.mxu0 %v557
    %1658 = vmatprep.subr.mxu0 %v555
    %1659 = vmatpush1.msra.mxu0 %v554
    %1660 = vmatprep.subr.mxu0 %v552
    %1661 = vmatpush1.msra.mxu0 %v551
    %1662 = vmatprep.subr.mxu0 0.0
    %1663 = vmatpush2.msra.mxu0 0.0
    %1664 = vmatprep.subr.mxu0 0.0
    %1665 = vmatpush2.msra.mxu0 0.0
    %1666 = vmatprep.subr.mxu0 0.0
    %1667 = vmatpush2.msra.mxu0 0.0
    %1668 = vmatprep.subr.mxu0 0.0
    %1669 = vmatpush2.msra.mxu0 0.0
    %1670 = vmatprep.subr.mxu0 0.0
    %1671 = vmatpush2.msra.mxu0 0.0
    %1672 = vmatprep.subr.mxu0 0.0
    %1673 = vmatpush2.msra.mxu0 0.0
    %1674 = vmatprep.subr.mxu0 0.0
    %1675 = vmatpush2.msra.mxu0 0.0
    %1676 = vmatprep.subr.mxu0 0.0
    %1677 = vmatpush2.msra.mxu0 0.0
    %1678 = vmatprep.subr.mxu0 0.0
    %1679 = vmatpush2.msra.mxu0 0.0
    %1680 = vmatprep.subr.mxu0 0.0
    %1681 = vmatpush2.msra.mxu0 0.0
    %1682 = vmatprep.subr.mxu0 0.0
    %1683 = vmatpush2.msra.mxu0 0.0
    %1684 = vmatprep.subr.mxu0 0.0
    %1685 = vmatpush2.msra.mxu0 0.0
    %1686 = vmatprep.subr.mxu0 0.0
    %1687 = vmatpush2.msra.mxu0 0.0
    %1688 = vmatprep.subr.mxu0 0.0
    %1689 = vmatpush2.msra.mxu0 0.0
    %1690 = vmatprep.subr.mxu0 0.0
    %1691 = vmatpush2.msra.mxu0 0.0
    %1692 = vmatprep.subr.mxu0 0.0
    %1693 = vmatpush2.msra.mxu0 0.0
    %1694 = vmatprep.mubr.f32.mxu0 0.0
    %1695 = vmatmul.mubr.f32.gmra.mxu0 %v1623
    %v1696 = vpop.f32.mrf.mxu0
    %v1697 = vadd.f32 %v604, %v1696
    %v1698 = vpop.f32.mrf.mxu0
    %v1699 = vadd.f32 %v608, %v1698
    %1700 = vdwg.mxu0
    %1701 = vmatprep.subr.mxu0 0.0
    %1702 = vmatpush1.msra.mxu0 %v598
    %1703 = vmatprep.subr.mxu0 0.0
    %1704 = vmatpush1.msra.mxu0 %v595
    %1705 = vmatprep.subr.mxu0 0.0
    %1706 = vmatpush1.msra.mxu0 %v592
    %1707 = vmatprep.subr.mxu0 0.0
    %1708 = vmatpush1.msra.mxu0 %v589
    %1709 = vmatprep.subr.mxu0 0.0
    %1710 = vmatpush1.msra.mxu0 %v586
    %1711 = vmatprep.subr.mxu0 0.0
    %1712 = vmatpush1.msra.mxu0 %v583
    %1713 = vmatprep.subr.mxu0 0.0
    %1714 = vmatpush1.msra.mxu0 %v580
    %1715 = vmatprep.subr.mxu0 0.0
    %1716 = vmatpush1.msra.mxu0 %v577
    %1717 = vmatprep.subr.mxu0 0.0
    %1718 = vmatpush1.msra.mxu0 %v574
    %1719 = vmatprep.subr.mxu0 0.0
    %1720 = vmatpush1.msra.mxu0 %v571
    %1721 = vmatprep.subr.mxu0 0.0
    %1722 = vmatpush1.msra.mxu0 %v568
    %1723 = vmatprep.subr.mxu0 0.0
    %1724 = vmatpush1.msra.mxu0 %v565
    %1725 = vmatprep.subr.mxu0 0.0
    %1726 = vmatpush1.msra.mxu0 %v562
    %1727 = vmatprep.subr.mxu0 0.0
    %1728 = vmatpush1.msra.mxu0 %v559
    %1729 = vmatprep.subr.mxu0 0.0
    %1730 = vmatpush1.msra.mxu0 %v556
    %1731 = vmatprep.subr.mxu0 0.0
    %1732 = vmatpush1.msra.mxu0 %v553
    %1733 = vmatprep.subr.mxu0 0.0
    %1734 = vmatpush2.msra.mxu0 0.0
    %1735 = vmatprep.subr.mxu0 0.0
    %1736 = vmatpush2.msra.mxu0 0.0
    %1737 = vmatprep.subr.mxu0 0.0
    %1738 = vmatpush2.msra.mxu0 0.0
    %1739 = vmatprep.subr.mxu0 0.0
    %1740 = vmatpush2.msra.mxu0 0.0
    %1741 = vmatprep.subr.mxu0 0.0
    %1742 = vmatpush2.msra.mxu0 0.0
    %1743 = vmatprep.subr.mxu0 0.0
    %1744 = vmatpush2.msra.mxu0 0.0
    %1745 = vmatprep.subr.mxu0 0.0
    %1746 = vmatpush2.msra.mxu0 0.0
    %1747 = vmatprep.subr.mxu0 0.0
    %1748 = vmatpush2.msra.mxu0 0.0
    %1749 = vmatprep.subr.mxu0 0.0
    %1750 = vmatpush2.msra.mxu0 0.0
    %1751 = vmatprep.subr.mxu0 0.0
    %1752 = vmatpush2.msra.mxu0 0.0
    %1753 = vmatprep.subr.mxu0 0.0
    %1754 = vmatpush2.msra.mxu0 0.0
    %1755 = vmatprep.subr.mxu0 0.0
    %1756 = vmatpush2.msra.mxu0 0.0
    %1757 = vmatprep.subr.mxu0 0.0
    %1758 = vmatpush2.msra.mxu0 0.0
    %1759 = vmatprep.subr.mxu0 0.0
    %1760 = vmatpush2.msra.mxu0 0.0
    %1761 = vmatprep.subr.mxu0 0.0
    %1762 = vmatpush2.msra.mxu0 0.0
    %1763 = vmatprep.subr.mxu0 0.0
    %1764 = vmatpush2.msra.mxu0 0.0
    %1765 = vmatprep.mubr.f32.mxu0 0.0
    %1766 = vmatmul.mubr.f32.gmra.mxu0 %v1623
    %v1767 = vpop.f32.mrf.mxu0
    %v1768 = vadd.f32 %v612, %v1767
    %v1769 = vpop.f32.mrf.mxu0
    %1770 = vdwg.mxu0
    %v1771 = vadd.f32 %v1627, %v1697
    %v1772 = vxor.u32 %v1771, 2147483648
    %v1773 = vmul.f32 %v1772, 1.442695
    %v1774 = vpow.pop %v1773
    %v1775 = vadd.f32 %v1774, 1.0
    %v1776 = vrcp.pop %v1775
    %v1777 = vmul.f32 1.0, %v1776
    %v1778 = vadd.f32 %v1628, %v1699
    %v1779 = vxor.u32 %v1778, 2147483648
    %v1780 = vmul.f32 %v1779, 1.442695
    %v1781 = vpow.pop %v1780
    %v1782 = vadd.f32 %v1781, 1.0
    %v1783 = vrcp.pop %v1782
    %v1784 = vmul.f32 1.0, %v1783
    %v1785 = vmul.f32 %v1777, %v1768
    %v1786 = vadd.f32 %v1629, %v1785
    %v1787 = vtanh.pop %v1786
    %v1788 = vsub.f32 1.0, %v1784
    %v1789 = vmul.f32 %v1788, %v1787
    %v1790 = vmul.f32 %v1784, %v1623
    %v1791 = vadd.f32 %v1789, %v1790
    %s1792 = smul.u32 7, 3
    %s1793 = smul.addr %s1792, 8
    %s1794 = scalar_lea.vmem [#allocation2], %s1793
    %v1795 = vld [vmem:[%s1794] sm:$0xff]
    %v1796 = vld [vmem:[%s1794 + $0x8] sm:$0xff]
    %v1797 = vld [vmem:[%s1794 + $0x10] sm:$0xff]
    %1798 = vmatprep.subr.mxu0 %v597
    %1799 = vmatpush1.msra.mxu0 %v596
    %1800 = vmatprep.subr.mxu0 %v594
    %1801 = vmatpush1.msra.mxu0 %v593
    %1802 = vmatprep.subr.mxu0 %v591
    %1803 = vmatpush1.msra.mxu0 %v590
    %1804 = vmatprep.subr.mxu0 %v588
    %1805 = vmatpush1.msra.mxu0 %v587
    %1806 = vmatprep.subr.mxu0 %v585
    %1807 = vmatpush1.msra.mxu0 %v584
    %1808 = vmatprep.subr.mxu0 %v582
    %1809 = vmatpush1.msra.mxu0 %v581
    %1810 = vmatprep.subr.mxu0 %v579
    %1811 = vmatpush1.msra.mxu0 %v578
    %1812 = vmatprep.subr.mxu0 %v576
    %1813 = vmatpush1.msra.mxu0 %v575
    %1814 = vmatprep.subr.mxu0 %v573
    %1815 = vmatpush1.msra.mxu0 %v572
    %1816 = vmatprep.subr.mxu0 %v570
    %1817 = vmatpush1.msra.mxu0 %v569
    %1818 = vmatprep.subr.mxu0 %v567
    %1819 = vmatpush1.msra.mxu0 %v566
    %1820 = vmatprep.subr.mxu0 %v564
    %1821 = vmatpush1.msra.mxu0 %v563
    %1822 = vmatprep.subr.mxu0 %v561
    %1823 = vmatpush1.msra.mxu0 %v560
    %1824 = vmatprep.subr.mxu0 %v558
    %1825 = vmatpush1.msra.mxu0 %v557
    %1826 = vmatprep.subr.mxu0 %v555
    %1827 = vmatpush1.msra.mxu0 %v554
    %1828 = vmatprep.subr.mxu0 %v552
    %1829 = vmatpush1.msra.mxu0 %v551
    %1830 = vmatprep.subr.mxu0 0.0
    %1831 = vmatpush2.msra.mxu0 0.0
    %1832 = vmatprep.subr.mxu0 0.0
    %1833 = vmatpush2.msra.mxu0 0.0
    %1834 = vmatprep.subr.mxu0 0.0
    %1835 = vmatpush2.msra.mxu0 0.0
    %1836 = vmatprep.subr.mxu0 0.0
    %1837 = vmatpush2.msra.mxu0 0.0
    %1838 = vmatprep.subr.mxu0 0.0
    %1839 = vmatpush2.msra.mxu0 0.0
    %1840 = vmatprep.subr.mxu0 0.0
    %1841 = vmatpush2.msra.mxu0 0.0
    %1842 = vmatprep.subr.mxu0 0.0
    %1843 = vmatpush2.msra.mxu0 0.0
    %1844 = vmatprep.subr.mxu0 0.0
    %1845 = vmatpush2.msra.mxu0 0.0
    %1846 = vmatprep.subr.mxu0 0.0
    %1847 = vmatpush2.msra.mxu0 0.0
    %1848 = vmatprep.subr.mxu0 0.0
    %1849 = vmatpush2.msra.mxu0 0.0
    %1850 = vmatprep.subr.mxu0 0.0
    %1851 = vmatpush2.msra.mxu0 0.0
    %1852 = vmatprep.subr.mxu0 0.0
    %1853 = vmatpush2.msra.mxu0 0.0
    %1854 = vmatprep.subr.mxu0 0.0
    %1855 = vmatpush2.msra.mxu0 0.0
    %1856 = vmatprep.subr.mxu0 0.0
    %1857 = vmatpush2.msra.mxu0 0.0
    %1858 = vmatprep.subr.mxu0 0.0
    %1859 = vmatpush2.msra.mxu0 0.0
    %1860 = vmatprep.subr.mxu0 0.0
    %1861 = vmatpush2.msra.mxu0 0.0
    %1862 = vmatprep.mubr.f32.mxu0 0.0
    %1863 = vmatmul.mubr.f32.gmra.mxu0 %v1791
    %v1864 = vpop.f32.mrf.mxu0
    %v1865 = vadd.f32 %v604, %v1864
    %v1866 = vpop.f32.mrf.mxu0
    %v1867 = vadd.f32 %v608, %v1866
    %1868 = vdwg.mxu0
    %1869 = vmatprep.subr.mxu0 0.0
    %1870 = vmatpush1.msra.mxu0 %v598
    %1871 = vmatprep.subr.mxu0 0.0
    %1872 = vmatpush1.msra.mxu0 %v595
    %1873 = vmatprep.subr.mxu0 0.0
    %1874 = vmatpush1.msra.mxu0 %v592
    %1875 = vmatprep.subr.mxu0 0.0
    %1876 = vmatpush1.msra.mxu0 %v589
    %1877 = vmatprep.subr.mxu0 0.0
    %1878 = vmatpush1.msra.mxu0 %v586
    %1879 = vmatprep.subr.mxu0 0.0
    %1880 = vmatpush1.msra.mxu0 %v583
    %1881 = vmatprep.subr.mxu0 0.0
    %1882 = vmatpush1.msra.mxu0 %v580
    %1883 = vmatprep.subr.mxu0 0.0
    %1884 = vmatpush1.msra.mxu0 %v577
    %1885 = vmatprep.subr.mxu0 0.0
    %1886 = vmatpush1.msra.mxu0 %v574
    %1887 = vmatprep.subr.mxu0 0.0
    %1888 = vmatpush1.msra.mxu0 %v571
    %1889 = vmatprep.subr.mxu0 0.0
    %1890 = vmatpush1.msra.mxu0 %v568
    %1891 = vmatprep.subr.mxu0 0.0
    %1892 = vmatpush1.msra.mxu0 %v565
    %1893 = vmatprep.subr.mxu0 0.0
    %1894 = vmatpush1.msra.mxu0 %v562
    %1895 = vmatprep.subr.mxu0 0.0
    %1896 = vmatpush1.msra.mxu0 %v559
    %1897 = vmatprep.subr.mxu0 0.0
    %1898 = vmatpush1.msra.mxu0 %v556
    %1899 = vmatprep.subr.mxu0 0.0
    %1900 = vmatpush1.msra.mxu0 %v553
    %1901 = vmatprep.subr.mxu0 0.0
    %1902 = vmatpush2.msra.mxu0 0.0
    %1903 = vmatprep.subr.mxu0 0.0
    %1904 = vmatpush2.msra.mxu0 0.0
    %1905 = vmatprep.subr.mxu0 0.0
    %1906 = vmatpush2.msra.mxu0 0.0
    %1907 = vmatprep.subr.mxu0 0.0
    %1908 = vmatpush2.msra.mxu0 0.0
    %1909 = vmatprep.subr.mxu0 0.0
    %1910 = vmatpush2.msra.mxu0 0.0
    %1911 = vmatprep.subr.mxu0 0.0
    %1912 = vmatpush2.msra.mxu0 0.0
    %1913 = vmatprep.subr.mxu0 0.0
    %1914 = vmatpush2.msra.mxu0 0.0
    %1915 = vmatprep.subr.mxu0 0.0
    %1916 = vmatpush2.msra.mxu0 0.0
    %1917 = vmatprep.subr.mxu0 0.0
    %1918 = vmatpush2.msra.mxu0 0.0
    %1919 = vmatprep.subr.mxu0 0.0
    %1920 = vmatpush2.msra.mxu0 0.0
    %1921 = vmatprep.subr.mxu0 0.0
    %1922 = vmatpush2.msra.mxu0 0.0
    %1923 = vmatprep.subr.mxu0 0.0
    %1924 = vmatpush2.msra.mxu0 0.0
    %1925 = vmatprep.subr.mxu0 0.0
    %1926 = vmatpush2.msra.mxu0 0.0
    %1927 = vmatprep.subr.mxu0 0.0
    %1928 = vmatpush2.msra.mxu0 0.0
    %1929 = vmatprep.subr.mxu0 0.0
    %1930 = vmatpush2.msra.mxu0 0.0
    %1931 = vmatprep.subr.mxu0 0.0
    %1932 = vmatpush2.msra.mxu0 0.0
    %1933 = vmatprep.mubr.f32.mxu0 0.0
    %1934 = vmatmul.mubr.f32.gmra.mxu0 %v1791
    %v1935 = vpop.f32.mrf.mxu0
    %v1936 = vadd.f32 %v612, %v1935
    %v1937 = vpop.f32.mrf.mxu0
    %1938 = vdwg.mxu0
    %v1939 = vadd.f32 %v1795, %v1865
    %v1940 = vxor.u32 %v1939, 2147483648
    %v1941 = vmul.f32 %v1940, 1.442695
    %v1942 = vpow.pop %v1941
    %v1943 = vadd.f32 %v1942, 1.0
    %v1944 = vrcp.pop %v1943
    %v1945 = vmul.f32 1.0, %v1944
    %v1946 = vadd.f32 %v1796, %v1867
    %v1947 = vxor.u32 %v1946, 2147483648
    %v1948 = vmul.f32 %v1947, 1.442695
    %v1949 = vpow.pop %v1948
    %v1950 = vadd.f32 %v1949, 1.0
    %v1951 = vrcp.pop %v1950
    %v1952 = vmul.f32 1.0, %v1951
    %v1953 = vmul.f32 %v1945, %v1936
    %v1954 = vadd.f32 %v1797, %v1953
    %v1955 = vtanh.pop %v1954
    %v1956 = vsub.f32 1.0, %v1952
    %v1957 = vmul.f32 %v1956, %v1955
    %v1958 = vmul.f32 %v1952, %v1791
    %v1959 = vadd.f32 %v1957, %v1958
    %1960 = vst [vmem:[#allocation9] sm:$0xff] %v1959
    // Predicated region
    $region38: #{tpu_custom_call.1} parent=1 // pred_check
      _
    $region39: #{tpu_custom_call.1} parent=1 // pred_check_branch
      %1962 = sbr.rel (0) target = $region41
    $region40: #{tpu_custom_call.1} parent=1 // pred_region
      %s1964 = ssub.s32 128, 128
      %1965 = vsyncadd [#allocation5], %s1964
      %s1967 = sshll.u32 [#allocation9], 4
      %s1968 = int_to_ptr.vmem [resolvable:$true] %s1967
      %1970 = dma.vmem_to_hbm [thread:$0]  %s1968, 128, %s6, [#allocation5]
    $region41: #{tpu_custom_call.1} parent=1 // pred_fallthru
      _
    // Predicated region
    $region42: #{tpu_custom_call.1} parent=1 // pred_check
      _
    $region43: #{tpu_custom_call.1} parent=1 // pred_check_branch
      %1972 = sbr.rel (0) target = $region45
    $region44: #{tpu_custom_call.1} parent=1 // pred_region
      %1973 = dma.done [#allocation5], 128
    $region45: #{tpu_custom_call.1} parent=1 // pred_fallthru
      _
    %1974 = vsyncpa [#allocation4], 1
    %1975 = vsyncpa [#allocation7], 1
    %1976 = vsyncpa [#allocation5], 1

</llo_original>
